<compile_context>
chip_gen: v7x
topology: tpu7x:2x2x1
jax: 0.10.0
libtpu: 0.0.40
codegen_flags: <defaults>
</compile_context>

<pallas_src>
import math

import jax
import jax.numpy as jnp
import numpy as np
from jax.experimental import pallas as pl
from jax.experimental.pallas import tpu as pltpu

_POS = np.float32(math.sqrt(2.0))          # lrelu gain on the positive branch
_NEG = np.float32(0.2 * math.sqrt(2.0))    # slope * gain on the negative branch


def _mlp_kernel(x_ref, w1_ref, b1_ref, w2_ref, b2_ref, o_ref):
    # fc1: (tm, C_in) @ (C_in, H) on the MXU. bf16 operands, f32 accumulation.
    # Weight gain 1/sqrt(C_in) is already folded into w1_ref.
    h = jnp.dot(x_ref[...].astype(jnp.bfloat16), w1_ref[...],
                preferred_element_type=jnp.float32)
    h = h + b1_ref[...]                                   # (tm, H) + (1, H)
    # bias_act('lrelu'): leaky_relu(0.2) then *sqrt(2), fused into a single
    # select + multiply on the VPU.
    h = jnp.where(h >= 0, _POS, _NEG) * h
    # fc2: (tm, H) @ (H, C_out); gain 1/sqrt(H) already folded into w2_ref.
    y = jnp.dot(h.astype(jnp.bfloat16), w2_ref[...],
                preferred_element_type=jnp.float32)
    o_ref[...] = (y + b2_ref[...]).astype(o_ref.dtype)
    # TODO(synk): for very large hidden dims, tile the hidden axis with a
    # lax.fori_loop + (tm, C_out) f32 accumulator to bound the live intermediate.


def prepare_mlp_params(w1, b1, w2, b2, *, compute_dtype=jnp.bfloat16):
    """One-time parameter prep (keep the result; do NOT redo per forward call):
    fold 1/sqrt(fan_in) weight gains, pre-transpose to (C_in, C_out) layout,
    cast matmul operands to bf16, reshape biases to (1, N) f32."""
    c_in = w1.shape[1]
    hidden = w2.shape[1]
    w1_t = (jnp.transpose(w1) * np.float32(1.0 / math.sqrt(c_in))).astype(compute_dtype)
    w2_t = (jnp.transpose(w2) * np.float32(1.0 / math.sqrt(hidden))).astype(compute_dtype)
    b1r = b1.reshape(1, -1).astype(jnp.float32)
    b2r = b2.reshape(1, -1).astype(jnp.float32)
    return w1_t, b1r, w2_t, b2r


def mlp_pallas(x, params, *, tm=256):
    """x: (M, C_in) token-major activations; params from prepare_mlp_params()."""
    w1_t, b1r, w2_t, b2r = params
    M, c_in = x.shape
    hidden = w1_t.shape[1]
    c_out = w2_t.shape[1]

    # Pad the row dimension to a multiple of the tile; slice back at the end.
    pad = (-M) % tm
    xp = jnp.pad(x, ((0, pad), (0, 0))) if pad else x
    mp = M + pad
    grid = (mp // tm,)

    def build(single_buffer_consts):
        const_kw = {"pipeline_mode": pl.Buffered(1)} if single_buffer_consts else {}
        in_specs = [
            pl.BlockSpec((tm, c_in), lambda i: (i, 0)),                  # x row tile
            pl.BlockSpec((c_in, hidden), lambda i: (0, 0), **const_kw),  # W1^T (resident)
            pl.BlockSpec((1, hidden), lambda i: (0, 0), **const_kw),     # b1
            pl.BlockSpec((hidden, c_out), lambda i: (0, 0), **const_kw), # W2^T (resident)
            pl.BlockSpec((1, c_out), lambda i: (0, 0), **const_kw),      # b2
        ]
        return pl.pallas_call(
            _mlp_kernel,
            out_shape=jax.ShapeDtypeStruct((mp, c_out), x.dtype),
            grid_spec=pltpu.PrefetchScalarGridSpec(
                num_scalar_prefetch=0,
                grid=grid,
                in_specs=in_specs,
                out_specs=pl.BlockSpec((tm, c_out), lambda i: (i, 0)),
            ),
            compiler_params=pltpu.CompilerParams(
                dimension_semantics=("parallel",)),
        )

    try:
        out = build(True)(xp, w1_t, b1r, w2_t, b2r)
        out = jax.block_until_ready(out)
    except Exception:
        # pipeline_mode=pl.Buffered(1) not supported on this jax version; the
        # default double-buffered pipeline is still correct, just uses a bit
        # more VMEM for the (small, resident) weights.
        out = build(False)(xp, w1_t, b1r, w2_t, b2r)

    return out[:M] if pad else out


def mlp_ref(x, w1, b1, w2, b2):
    """Pure-JAX f32 reference mirroring the PyTorch forward."""
    c_in = w1.shape[1]
    hidden = w2.shape[1]
    h = x @ (w1 * (1.0 / math.sqrt(c_in))).T + b1
    h = jnp.where(h >= 0, h, 0.2 * h) * math.sqrt(2.0)
    return h @ (w2 * (1.0 / math.sqrt(hidden))).T + b2


if __name__ == "__main__":
    key = jax.random.PRNGKey(0)
    kx, kw1, kb1, kw2, kb2 = jax.random.split(key, 5)

    # Token-major transformer-block shapes; feature dims are multiples of 128
    # so stores are lane-dense, and M=512 gives 2 parallel row tiles at tm=256.
    B, L = 2, 256
    in_features = 128
    hidden_features = 256
    out_features = 128          # Mlp: out_features defaults to in_features

    # Parameter shapes match FullyConnectedLayer.__init__: weight [out, in], bias [out].
    w1 = jax.random.normal(kw1, (hidden_features, in_features), jnp.float32)
    b1 = 0.1 * jax.random.normal(kb1, (hidden_features,), jnp.float32)
    w2 = jax.random.normal(kw2, (out_features, hidden_features), jnp.float32)
    b2 = 0.1 * jax.random.normal(kb2, (out_features,), jnp.float32)

    x = jax.random.normal(kx, (B, L, in_features), jnp.float32)
    x2d = x.reshape(B * L, in_features)

    params = prepare_mlp_params(w1, b1, w2, b2)   # one-time weight prep
    out = mlp_pallas(x2d, params, tm=256)
    out = jax.block_until_ready(out)
    out = out.reshape(B, L, out_features)

    ref = mlp_ref(x2d, w1, b1, w2, b2).reshape(B, L, out_features)
    # bf16 matmul operands (f32 accumulation) => slightly looser tolerance.
    np.testing.assert_allclose(np.asarray(out), np.asarray(ref),
                               rtol=5e-2, atol=5e-2)
    print("KERNEL_OK")
</pallas_src>

<mosaic_0001>
module attributes {stable_mosaic.version = 11 : i64} {
  func.func @_mlp_kernel(%arg0: i32, %arg1: memref<256x128xf32, #tpu.memory_space<vmem>>, %arg2: memref<128x256xbf16, #tpu.memory_space<vmem>>, %arg3: memref<1x256xf32, #tpu.memory_space<vmem>>, %arg4: memref<256x128xbf16, #tpu.memory_space<vmem>>, %arg5: memref<1x128xf32, #tpu.memory_space<vmem>>, %arg6: memref<256x128xf32, #tpu.memory_space<vmem>>) attributes {dimension_semantics = [#tpu.dimension_semantics<parallel>], iteration_bounds = array<i64: 2>, scalar_prefetch = 0 : i64, scratch_operands = 0 : i64, tpu.core_type = #tpu.core_type<tc>, window_params = [{transform_indices = @transform_0, window_bounds = array<i64: 256, 128>}, {pipeline_mode = #tpu.pipeline_mode<synchronous>, transform_indices = @transform_1, window_bounds = array<i64: 128, 256>}, {pipeline_mode = #tpu.pipeline_mode<synchronous>, transform_indices = @transform_2, window_bounds = array<i64: 1, 256>}, {pipeline_mode = #tpu.pipeline_mode<synchronous>, transform_indices = @transform_3, window_bounds = array<i64: 256, 128>}, {pipeline_mode = #tpu.pipeline_mode<synchronous>, transform_indices = @transform_4, window_bounds = array<i64: 1, 128>}, {transform_indices = @transform_5, window_bounds = array<i64: 256, 128>}]} {
    %c0 = arith.constant 0 : index
    %c0_0 = arith.constant 0 : index
    %0 = vector.load %arg1[%c0, %c0_0] : memref<256x128xf32, #tpu.memory_space<vmem>>, vector<256x128xf32>
    %1 = arith.truncf %0 : vector<256x128xf32> to vector<256x128xbf16>
    %c0_1 = arith.constant 0 : index
    %c0_2 = arith.constant 0 : index
    %2 = vector.load %arg2[%c0_1, %c0_2] : memref<128x256xbf16, #tpu.memory_space<vmem>>, vector<128x256xbf16>
    %cst = arith.constant dense<0.000000e+00> : vector<256x256xf32>
    %3 = tpu.matmul %1, %2, %cst {dimension_numbers = #tpu.dot_dimension_numbers<[1], [0], [0], [1], [0, 0, 1, 1], [], []>} : vector<256x128xbf16>, vector<128x256xbf16>, vector<256x256xf32> -> vector<256x256xf32>
    %c0_3 = arith.constant 0 : index
    %c0_4 = arith.constant 0 : index
    %4 = vector.load %arg3[%c0_3, %c0_4] : memref<1x256xf32, #tpu.memory_space<vmem>>, vector<1x256xf32>
    %5 = vector.broadcast %4 : vector<1x256xf32> to vector<256x256xf32>
    %6 = arith.addf %3, %5 : vector<256x256xf32>
    %cst_5 = arith.constant 0.000000e+00 : f32
    %7 = vector.broadcast %cst_5 : f32 to vector<256x256xf32>
    %8 = arith.cmpf oge, %6, %7 : vector<256x256xf32>
    %cst_6 = arith.constant 1.41421354 : f32
    %cst_7 = arith.constant 0.282842726 : f32
    %9 = vector.broadcast %cst_6 : f32 to vector<256x256xf32>
    %10 = vector.broadcast %cst_7 : f32 to vector<256x256xf32>
    %11 = arith.select %8, %9, %10 : vector<256x256xi1>, vector<256x256xf32>
    %12 = arith.mulf %11, %6 : vector<256x256xf32>
    %13 = arith.truncf %12 : vector<256x256xf32> to vector<256x256xbf16>
    %c0_8 = arith.constant 0 : index
    %c0_9 = arith.constant 0 : index
    %14 = vector.load %arg4[%c0_8, %c0_9] : memref<256x128xbf16, #tpu.memory_space<vmem>>, vector<256x128xbf16>
    %cst_10 = arith.constant dense<0.000000e+00> : vector<256x128xf32>
    %15 = tpu.matmul %13, %14, %cst_10 {dimension_numbers = #tpu.dot_dimension_numbers<[1], [0], [0], [1], [0, 0, 1, 1], [], []>} : vector<256x256xbf16>, vector<256x128xbf16>, vector<256x128xf32> -> vector<256x128xf32>
    %c0_11 = arith.constant 0 : index
    %c0_12 = arith.constant 0 : index
    %16 = vector.load %arg5[%c0_11, %c0_12] : memref<1x128xf32, #tpu.memory_space<vmem>>, vector<1x128xf32>
    %17 = vector.broadcast %16 : vector<1x128xf32> to vector<256x128xf32>
    %18 = arith.addf %15, %17 : vector<256x128xf32>
    %c0_13 = arith.constant 0 : index
    %c0_14 = arith.constant 0 : index
    %19 = vector.load %arg6[%c0_13, %c0_14] : memref<256x128xf32, #tpu.memory_space<vmem>>, vector<256x128xf32>
    tpu.vector_store %arg6[%c0_13, %c0_14], %18 {strides = array<i32>} : memref<256x128xf32, #tpu.memory_space<vmem>>, vector<256x128xf32>,
    return
  }
  func.func @transform_0(%arg0: i32) -> (i32, i32) {
    %c0_i32 = arith.constant 0 : i32
    %c0_i32_0 = arith.constant 0 : i32
    return %arg0, %c0_i32 : i32, i32
  }
  func.func @transform_1(%arg0: i32) -> (i32, i32) {
    %c0_i32 = arith.constant 0 : i32
    %c0_i32_0 = arith.constant 0 : i32
    %c0_i32_1 = arith.constant 0 : i32
    return %c0_i32, %c0_i32_0 : i32, i32
  }
  func.func @transform_2(%arg0: i32) -> (i32, i32) {
    %c0_i32 = arith.constant 0 : i32
    %c0_i32_0 = arith.constant 0 : i32
    %c0_i32_1 = arith.constant 0 : i32
    return %c0_i32, %c0_i32_0 : i32, i32
  }
  func.func @transform_3(%arg0: i32) -> (i32, i32) {
    %c0_i32 = arith.constant 0 : i32
    %c0_i32_0 = arith.constant 0 : i32
    %c0_i32_1 = arith.constant 0 : i32
    return %c0_i32, %c0_i32_0 : i32, i32
  }
  func.func @transform_4(%arg0: i32) -> (i32, i32) {
    %c0_i32 = arith.constant 0 : i32
    %c0_i32_0 = arith.constant 0 : i32
    %c0_i32_1 = arith.constant 0 : i32
    return %c0_i32, %c0_i32_0 : i32, i32
  }
  func.func @transform_5(%arg0: i32) -> (i32, i32) {
    %c0_i32 = arith.constant 0 : i32
    %c0_i32_0 = arith.constant 0 : i32
    return %arg0, %c0_i32 : i32, i32
  }
}

module attributes {stable_mosaic.version = 11 : i64} {
  func.func @_mlp_kernel(%arg0: i32, %arg1: memref<256x128xf32, #tpu.memory_space<vmem>>, %arg2: memref<128x256xbf16, #tpu.memory_space<vmem>>, %arg3: memref<1x256xf32, #tpu.memory_space<vmem>>, %arg4: memref<256x128xbf16, #tpu.memory_space<vmem>>, %arg5: memref<1x128xf32, #tpu.memory_space<vmem>>, %arg6: memref<256x128xf32, #tpu.memory_space<vmem>>) attributes {dimension_semantics = [#tpu.dimension_semantics<parallel>], iteration_bounds = array<i64: 2>, scalar_prefetch = 0 : i64, scratch_operands = 0 : i64, tpu.core_type = #tpu.core_type<tc>, window_params = [{transform_indices = @transform_0, window_bounds = array<i64: 256, 128>}, {pipeline_mode = #tpu.pipeline_mode<synchronous>, transform_indices = @transform_1, window_bounds = array<i64: 128, 256>}, {pipeline_mode = #tpu.pipeline_mode<synchronous>, transform_indices = @transform_2, window_bounds = array<i64: 1, 256>}, {pipeline_mode = #tpu.pipeline_mode<synchronous>, transform_indices = @transform_3, window_bounds = array<i64: 256, 128>}, {pipeline_mode = #tpu.pipeline_mode<synchronous>, transform_indices = @transform_4, window_bounds = array<i64: 1, 128>}, {transform_indices = @transform_5, window_bounds = array<i64: 256, 128>}]} {
    %c0 = arith.constant 0 : index
    %c0_0 = arith.constant 0 : index
    %0 = vector.load %arg1[%c0, %c0_0] : memref<256x128xf32, #tpu.memory_space<vmem>>, vector<256x128xf32>
    %1 = arith.truncf %0 : vector<256x128xf32> to vector<256x128xbf16>
    %c0_1 = arith.constant 0 : index
    %c0_2 = arith.constant 0 : index
    %2 = vector.load %arg2[%c0_1, %c0_2] : memref<128x256xbf16, #tpu.memory_space<vmem>>, vector<128x256xbf16>
    %cst = arith.constant dense<0.000000e+00> : vector<256x256xf32>
    %3 = tpu.matmul %1, %2, %cst {dimension_numbers = #tpu.dot_dimension_numbers<[1], [0], [0], [1], [0, 0, 1, 1], [], []>} : vector<256x128xbf16>, vector<128x256xbf16>, vector<256x256xf32> -> vector<256x256xf32>
    %c0_3 = arith.constant 0 : index
    %c0_4 = arith.constant 0 : index
    %4 = vector.load %arg3[%c0_3, %c0_4] : memref<1x256xf32, #tpu.memory_space<vmem>>, vector<1x256xf32>
    %5 = vector.broadcast %4 : vector<1x256xf32> to vector<256x256xf32>
    %6 = arith.addf %3, %5 : vector<256x256xf32>
    %cst_5 = arith.constant 0.000000e+00 : f32
    %7 = vector.broadcast %cst_5 : f32 to vector<256x256xf32>
    %8 = arith.cmpf oge, %6, %7 : vector<256x256xf32>
    %cst_6 = arith.constant 1.41421354 : f32
    %cst_7 = arith.constant 0.282842726 : f32
    %9 = vector.broadcast %cst_6 : f32 to vector<256x256xf32>
    %10 = vector.broadcast %cst_7 : f32 to vector<256x256xf32>
    %11 = arith.select %8, %9, %10 : vector<256x256xi1>, vector<256x256xf32>
    %12 = arith.mulf %11, %6 : vector<256x256xf32>
    %13 = arith.truncf %12 : vector<256x256xf32> to vector<256x256xbf16>
    %c0_8 = arith.constant 0 : index
    %c0_9 = arith.constant 0 : index
    %14 = vector.load %arg4[%c0_8, %c0_9] : memref<256x128xbf16, #tpu.memory_space<vmem>>, vector<256x128xbf16>
    %cst_10 = arith.constant dense<0.000000e+00> : vector<256x128xf32>
    %15 = tpu.matmul %13, %14, %cst_10 {dimension_numbers = #tpu.dot_dimension_numbers<[1], [0], [0], [1], [0, 0, 1, 1], [], []>} : vector<256x256xbf16>, vector<256x128xbf16>, vector<256x128xf32> -> vector<256x128xf32>
    %c0_11 = arith.constant 0 : index
    %c0_12 = arith.constant 0 : index
    %16 = vector.load %arg5[%c0_11, %c0_12] : memref<1x128xf32, #tpu.memory_space<vmem>>, vector<1x128xf32>
    %17 = vector.broadcast %16 : vector<1x128xf32> to vector<256x128xf32>
    %18 = arith.addf %15, %17 : vector<256x128xf32>
    %c0_13 = arith.constant 0 : index
    %c0_14 = arith.constant 0 : index
    %19 = vector.load %arg6[%c0_13, %c0_14] : memref<256x128xf32, #tpu.memory_space<vmem>>, vector<256x128xf32>
    tpu.vector_store %arg6[%c0_13, %c0_14], %18 {strides = array<i32>} : memref<256x128xf32, #tpu.memory_space<vmem>>, vector<256x128xf32>,
    return
  }
  func.func @transform_0(%arg0: i32) -> (i32, i32) {
    %c0_i32 = arith.constant 0 : i32
    %c0_i32_0 = arith.constant 0 : i32
    return %arg0, %c0_i32 : i32, i32
  }
  func.func @transform_1(%arg0: i32) -> (i32, i32) {
    %c0_i32 = arith.constant 0 : i32
    %c0_i32_0 = arith.constant 0 : i32
    %c0_i32_1 = arith.constant 0 : i32
    return %c0_i32, %c0_i32_0 : i32, i32
  }
  func.func @transform_2(%arg0: i32) -> (i32, i32) {
    %c0_i32 = arith.constant 0 : i32
    %c0_i32_0 = arith.constant 0 : i32
    %c0_i32_1 = arith.constant 0 : i32
    return %c0_i32, %c0_i32_0 : i32, i32
  }
  func.func @transform_3(%arg0: i32) -> (i32, i32) {
    %c0_i32 = arith.constant 0 : i32
    %c0_i32_0 = arith.constant 0 : i32
    %c0_i32_1 = arith.constant 0 : i32
    return %c0_i32, %c0_i32_0 : i32, i32
  }
  func.func @transform_4(%arg0: i32) -> (i32, i32) {
    %c0_i32 = arith.constant 0 : i32
    %c0_i32_0 = arith.constant 0 : i32
    %c0_i32_1 = arith.constant 0 : i32
    return %c0_i32, %c0_i32_0 : i32, i32
  }
  func.func @transform_5(%arg0: i32) -> (i32, i32) {
    %c0_i32 = arith.constant 0 : i32
    %c0_i32_0 = arith.constant 0 : i32
    return %arg0, %c0_i32 : i32, i32
  }
}

</mosaic_0001>

<llo_original>
// kernel: tpu_custom_call.1
$region0: #{tpu_custom_call.1}
  #allocation0 [shape = 'u32[]', space=smem, size = 0x4, offset = 0x4, fixed_abs, tag = 'smem constant byte address 0x4 - core index']
  #allocation1 [shape = 'u32[144,128]{1,0:T(1,128)}', space=vmem, size = 0x12000, scoped, tag = 'internal scratch']
  %s0 = inlined_call_operand.hbm [shape: f32[512,128], index: 0, kind: input, shape index: {}]
  %s1 = inlined_call_operand.hbm [shape: bf16[128,256], index: 1, kind: input, shape index: {}]
  %s2 = inlined_call_operand.vmem [shape: f32[1,256], index: 2, kind: input, shape index: {}]
  %s3 = inlined_call_operand.hbm [shape: bf16[256,128], index: 3, kind: input, shape index: {}]
  %s4 = inlined_call_operand.vmem [shape: f32[1,128], index: 4, kind: input, shape index: {}]
  %s5 = inlined_call_operand.hbm [shape: f32[512,128], index: 5, kind: output, shape index: {}]
  %s6 = sld [smem:[#allocation0]]
  $region65: #{tpu_custom_call.1} parent=0
    _
  %s8 = ssub.s32 1, %s6
  %s9 = scalar_select 0, %s8, %s6
  $region1: #{tpu_custom_call.1} parent=0
    #allocation2 [shape = 'u8[262144]{0}', space=vmem, size = 0x40000, scoped, tag = 'input window, operand 0']
    #allocation3 [shape = 's32[2]{0}', space=sflag, size = 0x8, scoped, tag = 'scoped memory for tpu_custom_call.1']
    #allocation4 [shape = 's32[2]{0}', space=sflag, size = 0x8, scoped, tag = 'scoped memory for tpu_custom_call.1']
    #allocation5 [shape = 'u8[65536]{0}', space=vmem, size = 0x10000, scoped, tag = 'input window, operand 1, single buffered']
    #allocation6 [shape = 's32[1]{0}', space=sflag, size = 0x4, scoped, tag = 'scoped memory for tpu_custom_call.1']
    #allocation7 [shape = 'u8[65536]{0}', space=vmem, size = 0x10000, scoped, tag = 'input window, operand 3, single buffered']
    #allocation8 [shape = 'u8[262144]{0}', space=vmem, size = 0x40000, scoped, tag = 'output window, operand 0']
    %10 = vsyncpa [#allocation3], 0
    %s11 = scalar_lea.sflag [#allocation3], 1
    %12 = vsyncpa %s11, 0
    %13 = vsyncpa [#allocation6], 0
    %14 = vsyncpa [#allocation4], 0
    %s15 = scalar_lea.sflag [#allocation4], 1
    %16 = vsyncpa %s15, 0
    loop: start=0, step=1, limit=4
    $region2: #{tpu_custom_call.1} parent=1 // loop_pre_header
      _
    $region3: #{tpu_custom_call.1} parent=1 // loop_header
      %s18 = sphi 0, %s22
      %p19 = scmp.ge.s32.totalorder %s18, 4
      %s28 = sphi 0, %s30
      %s31 = sphi 0, %s28
      %s32 = sphi 0, %s31
      %s48 = sphi 0, %s32
      %s52 = sphi 0, %s52
      %s54 = sphi 0, %s52
      %s55 = sphi 0, %s54
      %s69 = sphi 0, %s55
      %s73 = sphi 0, %s73
      %s75 = sphi 0, %s73
      %s76 = sphi 0, %s75
      %s90 = sphi 0, %s76
      %s94 = sphi 0, %s94
      %s96 = sphi 0, %s94
      %s97 = sphi 0, %s96
      %s111 = sphi 0, %s97
      %s115 = sphi 0, %s115
      %s117 = sphi 0, %s115
      %s118 = sphi 0, %s117
      %s132 = sphi 0, %s118
      %s138 = sphi 0, %s140
      %s141 = sphi 0, %s138
      %s142 = sphi 0, %s141
      %s158 = sphi 0, %s142
    $region4: #{tpu_custom_call.1} parent=1 // loop_header_branch
      %21 = sbr.rel (%p19) target = $region8
    $region5: #{tpu_custom_call.1} parent=1 // loop_body
      %s23 = ssub.s32 %s18, 1
      %s24 = ssub.s32 %s18, 2
      %s25 = sadd.s32 %s18, 1
      %s26 = ssub.s32 %s18, %s25
      %p27 = scmp.eq.s32.totalorder %s26, 0
      %s29 = sadd.s32 %s28, 1
      %s30 = scalar_select %p27, %s28, %s29
      %p33 = pneg %p27
      %p34 = scmp.eq.s32.totalorder %s18, 1
      %p35 = por %p33, %p34
      %p36 = scmp.ne.s32.totalorder %s28, %s31
      %p37 = scmp.eq.s32.totalorder %s18, 0
      %p38 = por %p36, %p37
      %p39 = scmp.ne.s32.totalorder %s28, %s31
      %p40 = scmp.eq.s32.totalorder %s23, 1
      %p41 = por %p39, %p40
      %p42 = scmp.ne.s32.totalorder %s31, %s32
      %p43 = scmp.eq.s32.totalorder %s23, 0
      %p44 = por %p42, %p43
      %p45 = scmp.ne.s32.totalorder %s31, %s32
      %p46 = scmp.eq.s32.totalorder %s24, 1
      %p47 = por %p45, %p46
      %p49 = scmp.ne.s32.totalorder %s32, %s48
      %p50 = scmp.eq.s32.totalorder %s24, 0
      %p51 = por %p49, %p50
      %s53 = sadd.s32 %s52, 1
      %p56 = scmp.eq.s32.totalorder %s18, 1
      %p57 = scmp.ne.s32.totalorder %s52, %s54
      %p58 = scmp.eq.s32.totalorder %s18, 0
      %p59 = por %p57, %p58
      %p60 = scmp.ne.s32.totalorder %s52, %s54
      %p61 = scmp.eq.s32.totalorder %s23, 1
      %p62 = por %p60, %p61
      %p63 = scmp.ne.s32.totalorder %s54, %s55
      %p64 = scmp.eq.s32.totalorder %s23, 0
      %p65 = por %p63, %p64
      %p66 = scmp.ne.s32.totalorder %s54, %s55
      %p67 = scmp.eq.s32.totalorder %s24, 1
      %p68 = por %p66, %p67
      %p70 = scmp.ne.s32.totalorder %s55, %s69
      %p71 = scmp.eq.s32.totalorder %s24, 0
      %p72 = por %p70, %p71
      %s74 = sadd.s32 %s73, 1
      %p77 = scmp.eq.s32.totalorder %s18, 1
      %p78 = scmp.ne.s32.totalorder %s73, %s75
      %p79 = scmp.eq.s32.totalorder %s18, 0
      %p80 = por %p78, %p79
      %p81 = scmp.ne.s32.totalorder %s73, %s75
      %p82 = scmp.eq.s32.totalorder %s23, 1
      %p83 = por %p81, %p82
      %p84 = scmp.ne.s32.totalorder %s75, %s76
      %p85 = scmp.eq.s32.totalorder %s23, 0
      %p86 = por %p84, %p85
      %p87 = scmp.ne.s32.totalorder %s75, %s76
      %p88 = scmp.eq.s32.totalorder %s24, 1
      %p89 = por %p87, %p88
      %p91 = scmp.ne.s32.totalorder %s76, %s90
      %p92 = scmp.eq.s32.totalorder %s24, 0
      %p93 = por %p91, %p92
      %s95 = sadd.s32 %s94, 1
      %p98 = scmp.eq.s32.totalorder %s18, 1
      %p99 = scmp.ne.s32.totalorder %s94, %s96
      %p100 = scmp.eq.s32.totalorder %s18, 0
      %p101 = por %p99, %p100
      %p102 = scmp.ne.s32.totalorder %s94, %s96
      %p103 = scmp.eq.s32.totalorder %s23, 1
      %p104 = por %p102, %p103
      %p105 = scmp.ne.s32.totalorder %s96, %s97
      %p106 = scmp.eq.s32.totalorder %s23, 0
      %p107 = por %p105, %p106
      %p108 = scmp.ne.s32.totalorder %s96, %s97
      %p109 = scmp.eq.s32.totalorder %s24, 1
      %p110 = por %p108, %p109
      %p112 = scmp.ne.s32.totalorder %s97, %s111
      %p113 = scmp.eq.s32.totalorder %s24, 0
      %p114 = por %p112, %p113
      %s116 = sadd.s32 %s115, 1
      %p119 = scmp.eq.s32.totalorder %s18, 1
      %p120 = scmp.ne.s32.totalorder %s115, %s117
      %p121 = scmp.eq.s32.totalorder %s18, 0
      %p122 = por %p120, %p121
      %p123 = scmp.ne.s32.totalorder %s115, %s117
      %p124 = scmp.eq.s32.totalorder %s23, 1
      %p125 = por %p123, %p124
      %p126 = scmp.ne.s32.totalorder %s117, %s118
      %p127 = scmp.eq.s32.totalorder %s23, 0
      %p128 = por %p126, %p127
      %p129 = scmp.ne.s32.totalorder %s117, %s118
      %p130 = scmp.eq.s32.totalorder %s24, 1
      %p131 = por %p129, %p130
      %p133 = scmp.ne.s32.totalorder %s118, %s132
      %p134 = scmp.eq.s32.totalorder %s24, 0
      %p135 = por %p133, %p134
      %s136 = ssub.s32 %s18, %s25
      %p137 = scmp.eq.s32.totalorder %s136, 0
      %s139 = sadd.s32 %s138, 1
      %s140 = scalar_select %p137, %s138, %s139
      %p143 = pneg %p137
      %p144 = scmp.eq.s32.totalorder %s18, 1
      %p145 = por %p143, %p144
      %p146 = scmp.ne.s32.totalorder %s138, %s141
      %p147 = scmp.eq.s32.totalorder %s18, 0
      %p148 = por %p146, %p147
      %p149 = scmp.ne.s32.totalorder %s138, %s141
      %p150 = scmp.eq.s32.totalorder %s23, 1
      %p151 = por %p149, %p150
      %p152 = scmp.ne.s32.totalorder %s141, %s142
      %p153 = scmp.eq.s32.totalorder %s23, 0
      %p154 = por %p152, %p153
      %p155 = scmp.ne.s32.totalorder %s141, %s142
      %p156 = scmp.eq.s32.totalorder %s24, 1
      %p157 = por %p155, %p156
      %p159 = scmp.ne.s32.totalorder %s142, %s158
      %p160 = scmp.eq.s32.totalorder %s24, 0
      %p161 = por %p159, %p160
      %p162 = scmp.le.s32.totalorder 1, %s18
      %p163 = scmp.lt.s32.totalorder %s18, 3
      %p164 = pnand %p162, %p163
      %p165 = pneg %p164
      // Predicated region
      $region9: #{tpu_custom_call.1} parent=5 // pred_check
        _
      $region10: #{tpu_custom_call.1} parent=5 // pred_check_branch
        %167 = sbr.rel (%p164) target = $region12
      $region11: #{tpu_custom_call.1} parent=5 // pred_region
        %s168 = ssub.s32 %s18, 1
        // Predicated region
        $region13: #{tpu_custom_call.1} parent=11 // pred_check
          %p169 = pneg %p65
        $region14: #{tpu_custom_call.1} parent=11 // pred_check_branch
          %171 = sbr.rel (%p169) target = $region16
        $region15: #{tpu_custom_call.1} parent=11 // pred_region
          %s173 = ssub.s32 2048, 2048
          %174 = vsyncadd [#allocation6], %s173
          %s175 = sshll.u32 [#allocation5], 4
          %s176 = int_to_ptr.vmem [resolvable:$true] %s175
          %181 = dma.hbm_to_vmem [thread:$0]  %s1, 2048, %s176, [#allocation6], 128, 128, 8
        $region16: #{tpu_custom_call.1} parent=11 // pred_fallthru
          _
        // Predicated region
        $region17: #{tpu_custom_call.1} parent=11 // pred_check
          %p182 = pneg %p86
        $region18: #{tpu_custom_call.1} parent=11 // pred_check_branch
          %184 = sbr.rel (%p182) target = $region20
        $region19: #{tpu_custom_call.1} parent=11 // pred_region
          _
        $region20: #{tpu_custom_call.1} parent=11 // pred_fallthru
          _
        // Predicated region
        $region21: #{tpu_custom_call.1} parent=11 // pred_check
          %p185 = pneg %p107
        $region22: #{tpu_custom_call.1} parent=11 // pred_check_branch
          %187 = sbr.rel (%p185) target = $region24
        $region23: #{tpu_custom_call.1} parent=11 // pred_region
          %s189 = ssub.s32 2048, 2048
          %190 = vsyncadd [#allocation6], %s189
          %s191 = sshll.u32 [#allocation7], 4
          %s192 = int_to_ptr.vmem [resolvable:$true] %s191
          %197 = dma.hbm_to_vmem [thread:$0]  %s3, 2048, %s192, [#allocation6], 64, 64, 4
        $region24: #{tpu_custom_call.1} parent=11 // pred_fallthru
          _
        // Predicated region
        $region25: #{tpu_custom_call.1} parent=11 // pred_check
          %p198 = pneg %p128
        $region26: #{tpu_custom_call.1} parent=11 // pred_check_branch
          %200 = sbr.rel (%p198) target = $region28
        $region27: #{tpu_custom_call.1} parent=11 // pred_region
          _
        $region28: #{tpu_custom_call.1} parent=11 // pred_fallthru
          _
      $region12: #{tpu_custom_call.1} parent=5 // pred_fallthru
        _
      %p201 = scmp.lt.s32.totalorder %s18, 2
      // Predicated region
      $region29: #{tpu_custom_call.1} parent=5 // pred_check
        %p202 = pneg %p201
      $region30: #{tpu_custom_call.1} parent=5 // pred_check_branch
        %204 = sbr.rel (%p202) target = $region32
      $region31: #{tpu_custom_call.1} parent=5 // pred_region
        // Predicated region
        $region33: #{tpu_custom_call.1} parent=31 // pred_check
          %p205 = pneg %p38
        $region34: #{tpu_custom_call.1} parent=31 // pred_check_branch
          %207 = sbr.rel (%p205) target = $region36
        $region35: #{tpu_custom_call.1} parent=31 // pred_region
          %s208 = sand.u32 %s28, 1
          %s209 = scalar_lea.sflag [#allocation3], %s208
          %s210 = sand.u32 %s28, 1
          %s211 = smul.addr %s210, 256
          %s212 = scalar_lea.vmem [#allocation2], %s211
          %s213 = smul.u32 32, %s18
          %s215 = ssub.s32 4096, 4096
          %216 = vsyncadd %s209, %s215
          %s217 = smul.addr %s213, 128
          %s218 = scalar_lea.hbm %s0, %s217
          %s219 = sshll.u32 %s212, 4
          %s220 = int_to_ptr.vmem [resolvable:$true] %s219
          %225 = dma.hbm_to_vmem [thread:$0]  %s218, 4096, %s220, %s209, 128, 128, 8
        $region36: #{tpu_custom_call.1} parent=31 // pred_fallthru
          _
      $region32: #{tpu_custom_call.1} parent=5 // pred_fallthru
        _
      %p226 = scmp.le.s32.totalorder 1, %s18
      %p227 = scmp.lt.s32.totalorder %s18, 3
      %p228 = pnand %p226, %p227
      %p229 = pneg %p228
      // Predicated region
      $region37: #{tpu_custom_call.1} parent=5 // pred_check
        _
      $region38: #{tpu_custom_call.1} parent=5 // pred_check_branch
        %231 = sbr.rel (%p228) target = $region40
      $region39: #{tpu_custom_call.1} parent=5 // pred_region
        %s232 = ssub.s32 %s18, 1
        %s233 = sand.u32 %s31, 1
        %s234 = scalar_lea.sflag [#allocation3], %s233
        %s235 = sand.u32 %s31, 1
        %s236 = smul.addr %s235, 256
        %s237 = scalar_lea.vmem [#allocation2], %s236
        // Predicated region
        $region41: #{tpu_custom_call.1} parent=39 // pred_check
          %p238 = pneg %p44
        $region42: #{tpu_custom_call.1} parent=39 // pred_check_branch
          %240 = sbr.rel (%p238) target = $region44
        $region43: #{tpu_custom_call.1} parent=39 // pred_region
          %241 = dma.done %s234, 4096
        $region44: #{tpu_custom_call.1} parent=39 // pred_fallthru
          _
        // Predicated region
        $region45: #{tpu_custom_call.1} parent=39 // pred_check
          %p242 = pneg %p65
        $region46: #{tpu_custom_call.1} parent=39 // pred_check_branch
          %244 = sbr.rel (%p242) target = $region48
        $region47: #{tpu_custom_call.1} parent=39 // pred_region
          %245 = dma.done [#allocation6], 2048
        $region48: #{tpu_custom_call.1} parent=39 // pred_fallthru
          _
        // Predicated region
        $region49: #{tpu_custom_call.1} parent=39 // pred_check
          %p246 = pneg %p107
        $region50: #{tpu_custom_call.1} parent=39 // pred_check_branch
          %248 = sbr.rel (%p246) target = $region52
        $region51: #{tpu_custom_call.1} parent=39 // pred_region
          %249 = dma.done [#allocation6], 2048
        $region52: #{tpu_custom_call.1} parent=39 // pred_fallthru
          _
        %s250 = sand.u32 %s31, 1
        %s251 = scalar_lea.sflag [#allocation3], %s250
        %s252 = sand.u32 %s31, 1
        %s253 = smul.addr %s252, 256
        %s254 = scalar_lea.vmem [#allocation2], %s253
        %p255 = pneg %p44
        %p256 = pneg %p41
        %p257 = pneg %p65
        %p258 = pneg %p62
        %p259 = pneg %p86
        %p260 = pneg %p83
        %p261 = pneg %p107
        %p262 = pneg %p104
        %p263 = pneg %p128
        %p264 = pneg %p125
        %p265 = pneg %p154
        %p266 = pneg %p151
        %s267 = sand.u32 %s141, 1
        %s268 = scalar_lea.sflag [#allocation4], %s267
        %s269 = sand.u32 %s141, 1
        %s270 = smul.addr %s269, 256
        %s271 = scalar_lea.vmem [#allocation8], %s270
        %s272 = smul.u32 32, %s23
        %s273 = smul.u32 32, %s23
        %v275 = vld [vmem:[%s237] sm:$0xff]
        %v276 = vld [vmem:[%s237 + $0x8] sm:$0xff]
        %v277 = vld [vmem:[%s237 + $0x10] sm:$0xff]
        %v278 = vld [vmem:[%s237 + $0x18] sm:$0xff]
        %v279 = vld [vmem:[%s237 + $0x20] sm:$0xff]
        %v280 = vld [vmem:[%s237 + $0x28] sm:$0xff]
        %v281 = vld [vmem:[%s237 + $0x30] sm:$0xff]
        %v282 = vld [vmem:[%s237 + $0x38] sm:$0xff]
        %v283 = vld [vmem:[%s237 + $0x40] sm:$0xff]
        %v284 = vld [vmem:[%s237 + $0x48] sm:$0xff]
        %v285 = vld [vmem:[%s237 + $0x50] sm:$0xff]
        %v286 = vld [vmem:[%s237 + $0x58] sm:$0xff]
        %v287 = vld [vmem:[%s237 + $0x60] sm:$0xff]
        %v288 = vld [vmem:[%s237 + $0x68] sm:$0xff]
        %v289 = vld [vmem:[%s237 + $0x70] sm:$0xff]
        %v290 = vld [vmem:[%s237 + $0x78] sm:$0xff]
        %v291 = vld [vmem:[%s237 + $0x80] sm:$0xff]
        %v292 = vld [vmem:[%s237 + $0x88] sm:$0xff]
        %v293 = vld [vmem:[%s237 + $0x90] sm:$0xff]
        %v294 = vld [vmem:[%s237 + $0x98] sm:$0xff]
        %v295 = vld [vmem:[%s237 + $0xa0] sm:$0xff]
        %v296 = vld [vmem:[%s237 + $0xa8] sm:$0xff]
        %v297 = vld [vmem:[%s237 + $0xb0] sm:$0xff]
        %v298 = vld [vmem:[%s237 + $0xb8] sm:$0xff]
        %v299 = vld [vmem:[%s237 + $0xc0] sm:$0xff]
        %v300 = vld [vmem:[%s237 + $0xc8] sm:$0xff]
        %v301 = vld [vmem:[%s237 + $0xd0] sm:$0xff]
        %v302 = vld [vmem:[%s237 + $0xd8] sm:$0xff]
        %v303 = vld [vmem:[%s237 + $0xe0] sm:$0xff]
        %v304 = vld [vmem:[%s237 + $0xe8] sm:$0xff]
        %v305 = vld [vmem:[%s237 + $0xf0] sm:$0xff]
        %v306 = vld [vmem:[%s237 + $0xf8] sm:$0xff]
        %v307 = vpack.c.bf16 %v276, %v275
        %v308 = vpack.c.bf16 %v278, %v277
        %v309 = vpack.c.bf16 %v280, %v279
        %v310 = vpack.c.bf16 %v282, %v281
        %v311 = vpack.c.bf16 %v284, %v283
        %v312 = vpack.c.bf16 %v286, %v285
        %v313 = vpack.c.bf16 %v288, %v287
        %v314 = vpack.c.bf16 %v290, %v289
        %v315 = vpack.c.bf16 %v292, %v291
        %v316 = vpack.c.bf16 %v294, %v293
        %v317 = vpack.c.bf16 %v296, %v295
        %v318 = vpack.c.bf16 %v298, %v297
        %v319 = vpack.c.bf16 %v300, %v299
        %v320 = vpack.c.bf16 %v302, %v301
        %v321 = vpack.c.bf16 %v304, %v303
        %v322 = vpack.c.bf16 %v306, %v305
        %v323 = vld [vmem:[#allocation5] sm:$0xff]
        %v324 = vld [vmem:[#allocation5 + $0x8] sm:$0xff]
        %v325 = vld [vmem:[#allocation5 + $0x10] sm:$0xff]
        %v326 = vld [vmem:[#allocation5 + $0x18] sm:$0xff]
        %v327 = vld [vmem:[#allocation5 + $0x20] sm:$0xff]
        %v328 = vld [vmem:[#allocation5 + $0x28] sm:$0xff]
        %v329 = vld [vmem:[#allocation5 + $0x30] sm:$0xff]
        %v330 = vld [vmem:[#allocation5 + $0x38] sm:$0xff]
        %v331 = vld [vmem:[#allocation5 + $0x40] sm:$0xff]
        %v332 = vld [vmem:[#allocation5 + $0x48] sm:$0xff]
        %v333 = vld [vmem:[#allocation5 + $0x50] sm:$0xff]
        %v334 = vld [vmem:[#allocation5 + $0x58] sm:$0xff]
        %v335 = vld [vmem:[#allocation5 + $0x60] sm:$0xff]
        %v336 = vld [vmem:[#allocation5 + $0x68] sm:$0xff]
        %v337 = vld [vmem:[#allocation5 + $0x70] sm:$0xff]
        %v338 = vld [vmem:[#allocation5 + $0x78] sm:$0xff]
        %v339 = vld [vmem:[%s2] sm:$0x3]
        %v341 = vlaneseq
        %v342 = vshrl.u32 %v341, 7
        %v343 = vsub.s32 0, %v342
        %v344 = vrot.slane %v339, %v343
        %v345 = vlaneseq
        %v346 = vshrl.u32 %v345, 7
        %v347 = vsub.s32 1, %v346
        %v348 = vrot.slane %v339, %v347
        %v367 = vunpack.c.l.b16 %v323
        %v368 = vunpack.c.h.b16 %v323
        %v369 = vunpack.c.l.b16 %v324
        %v370 = vunpack.c.h.b16 %v324
        %v371 = vunpack.c.l.b16 %v325
        %v372 = vunpack.c.h.b16 %v325
        %v373 = vunpack.c.l.b16 %v326
        %v374 = vunpack.c.h.b16 %v326
        %v375 = vunpack.c.l.b16 %v327
        %v376 = vunpack.c.h.b16 %v327
        %v377 = vunpack.c.l.b16 %v328
        %v378 = vunpack.c.h.b16 %v328
        %v379 = vunpack.c.l.b16 %v329
        %v380 = vunpack.c.h.b16 %v329
        %v381 = vunpack.c.l.b16 %v330
        %v382 = vunpack.c.h.b16 %v330
        %v383 = vunpack.c.l.b16 %v331
        %v384 = vunpack.c.h.b16 %v331
        %v385 = vunpack.c.l.b16 %v332
        %v386 = vunpack.c.h.b16 %v332
        %v387 = vunpack.c.l.b16 %v333
        %v388 = vunpack.c.h.b16 %v333
        %v389 = vunpack.c.l.b16 %v334
        %v390 = vunpack.c.h.b16 %v334
        %v391 = vunpack.c.l.b16 %v335
        %v392 = vunpack.c.h.b16 %v335
        %v393 = vunpack.c.l.b16 %v336
        %v394 = vunpack.c.h.b16 %v336
        %v395 = vunpack.c.l.b16 %v337
        %v396 = vunpack.c.h.b16 %v337
        %v397 = vunpack.c.l.b16 %v338
        %v398 = vunpack.c.h.b16 %v338
        %v399 = vpack.c.b16 %v369, %v367
        %v400 = vpack.c.b16 %v370, %v368
        %v401 = vpack.c.b16 %v373, %v371
        %v402 = vpack.c.b16 %v374, %v372
        %v403 = vpack.c.b16 %v377, %v375
        %v404 = vpack.c.b16 %v378, %v376
        %v405 = vpack.c.b16 %v381, %v379
        %v406 = vpack.c.b16 %v382, %v380
        %v407 = vpack.c.b16 %v385, %v383
        %v408 = vpack.c.b16 %v386, %v384
        %v409 = vpack.c.b16 %v389, %v387
        %v410 = vpack.c.b16 %v390, %v388
        %v411 = vpack.c.b16 %v393, %v391
        %v412 = vpack.c.b16 %v394, %v392
        %v413 = vpack.c.b16 %v397, %v395
        %v414 = vpack.c.b16 %v398, %v396
        %431 = vmatprep.subr.bf16.mxu0 %v400
        %432 = vmatpush1.bf16.msra.mxu0 %v399
        %433 = vmatprep.subr.bf16.mxu0 %v402
        %434 = vmatpush1.bf16.msra.mxu0 %v401
        %435 = vmatprep.subr.bf16.mxu0 %v404
        %436 = vmatpush1.bf16.msra.mxu0 %v403
        %437 = vmatprep.subr.bf16.mxu0 %v406
        %438 = vmatpush1.bf16.msra.mxu0 %v405
        %439 = vmatprep.subr.bf16.mxu0 %v408
        %440 = vmatpush1.bf16.msra.mxu0 %v407
        %441 = vmatprep.subr.bf16.mxu0 %v410
        %442 = vmatpush1.bf16.msra.mxu0 %v409
        %443 = vmatprep.subr.bf16.mxu0 %v412
        %444 = vmatpush1.bf16.msra.mxu0 %v411
        %445 = vmatprep.subr.bf16.mxu0 %v414
        %446 = vmatpush1.bf16.msra.mxu0 %v413
        %447 = vmatprep.subr.bf16.mxu0 0
        %448 = vmatpush1.bf16.msra.mxu0 0
        %449 = vmatprep.subr.bf16.mxu0 0
        %450 = vmatpush1.bf16.msra.mxu0 0
        %451 = vmatprep.subr.bf16.mxu0 0
        %452 = vmatpush1.bf16.msra.mxu0 0
        %453 = vmatprep.subr.bf16.mxu0 0
        %454 = vmatpush1.bf16.msra.mxu0 0
        %455 = vmatprep.subr.bf16.mxu0 0
        %456 = vmatpush1.bf16.msra.mxu0 0
        %457 = vmatprep.subr.bf16.mxu0 0
        %458 = vmatpush1.bf16.msra.mxu0 0
        %459 = vmatprep.subr.bf16.mxu0 0
        %460 = vmatpush1.bf16.msra.mxu0 0
        %461 = vmatprep.subr.bf16.mxu0 0
        %462 = vmatpush1.bf16.msra.mxu0 0
        %463 = vmatprep.mubr.bf16.mxu0 0
        %464 = vmatmul.mubr.bf16.gmra.mrb[0].mxu0 %v307
        %v465 = vpop.f32.mrb[0].mxu0
        %v466 = vadd.f32 %v344, %v465
        %v467 = vpop.f32.mrb[0].mxu0
        %v468 = vadd.f32 %v348, %v467
        %v469 = vpop.f32.mrb[0].mxu0
        %v470 = vadd.f32 %v344, %v469
        %v471 = vpop.f32.mrb[0].mxu0
        %v472 = vadd.f32 %v348, %v471
        %473 = vmatprep.mubr.bf16.mxu0 0
        %474 = vmatmul.mubr.bf16.gmra.mrb[0].mxu0 %v308
        %v475 = vpop.f32.mrb[0].mxu0
        %v476 = vadd.f32 %v344, %v475
        %v477 = vpop.f32.mrb[0].mxu0
        %v478 = vadd.f32 %v348, %v477
        %v479 = vpop.f32.mrb[0].mxu0
        %v480 = vadd.f32 %v344, %v479
        %v481 = vpop.f32.mrb[0].mxu0
        %v482 = vadd.f32 %v348, %v481
        %483 = vmatprep.mubr.bf16.mxu0 0
        %484 = vmatmul.mubr.bf16.gmra.mrb[0].mxu0 %v309
        %v485 = vpop.f32.mrb[0].mxu0
        %v486 = vadd.f32 %v344, %v485
        %v487 = vpop.f32.mrb[0].mxu0
        %v488 = vadd.f32 %v348, %v487
        %v489 = vpop.f32.mrb[0].mxu0
        %v490 = vadd.f32 %v344, %v489
        %v491 = vpop.f32.mrb[0].mxu0
        %v492 = vadd.f32 %v348, %v491
        %493 = vmatprep.mubr.bf16.mxu0 0
        %494 = vmatmul.mubr.bf16.gmra.mrb[0].mxu0 %v310
        %v495 = vpop.f32.mrb[0].mxu0
        %v496 = vadd.f32 %v344, %v495
        %v497 = vpop.f32.mrb[0].mxu0
        %v498 = vadd.f32 %v348, %v497
        %v499 = vpop.f32.mrb[0].mxu0
        %v500 = vadd.f32 %v344, %v499
        %v501 = vpop.f32.mrb[0].mxu0
        %v502 = vadd.f32 %v348, %v501
        %503 = vmatprep.mubr.bf16.mxu0 0
        %504 = vmatmul.mubr.bf16.gmra.mrb[0].mxu0 %v311
        %v505 = vpop.f32.mrb[0].mxu0
        %v506 = vadd.f32 %v344, %v505
        %v507 = vpop.f32.mrb[0].mxu0
        %v508 = vadd.f32 %v348, %v507
        %v509 = vpop.f32.mrb[0].mxu0
        %v510 = vadd.f32 %v344, %v509
        %v511 = vpop.f32.mrb[0].mxu0
        %v512 = vadd.f32 %v348, %v511
        %513 = vmatprep.mubr.bf16.mxu0 0
        %514 = vmatmul.mubr.bf16.gmra.mrb[0].mxu0 %v312
        %v515 = vpop.f32.mrb[0].mxu0
        %v516 = vadd.f32 %v344, %v515
        %v517 = vpop.f32.mrb[0].mxu0
        %v518 = vadd.f32 %v348, %v517
        %v519 = vpop.f32.mrb[0].mxu0
        %v520 = vadd.f32 %v344, %v519
        %v521 = vpop.f32.mrb[0].mxu0
        %v522 = vadd.f32 %v348, %v521
        %523 = vmatprep.mubr.bf16.mxu0 0
        %524 = vmatmul.mubr.bf16.gmra.mrb[0].mxu0 %v313
        %v525 = vpop.f32.mrb[0].mxu0
        %v526 = vadd.f32 %v344, %v525
        %v527 = vpop.f32.mrb[0].mxu0
        %v528 = vadd.f32 %v348, %v527
        %v529 = vpop.f32.mrb[0].mxu0
        %v530 = vadd.f32 %v344, %v529
        %v531 = vpop.f32.mrb[0].mxu0
        %v532 = vadd.f32 %v348, %v531
        %533 = vmatprep.mubr.bf16.mxu0 0
        %534 = vmatmul.mubr.bf16.gmra.mrb[0].mxu0 %v314
        %v535 = vpop.f32.mrb[0].mxu0
        %v536 = vadd.f32 %v344, %v535
        %v537 = vpop.f32.mrb[0].mxu0
        %v538 = vadd.f32 %v348, %v537
        %v539 = vpop.f32.mrb[0].mxu0
        %v540 = vadd.f32 %v344, %v539
        %v541 = vpop.f32.mrb[0].mxu0
        %v542 = vadd.f32 %v348, %v541
        %543 = vmatprep.mubr.bf16.mxu0 0
        %544 = vmatmul.mubr.bf16.gmra.mrb[0].mxu0 %v315
        %v545 = vpop.f32.mrb[0].mxu0
        %v546 = vadd.f32 %v344, %v545
        %v547 = vpop.f32.mrb[0].mxu0
        %v548 = vadd.f32 %v348, %v547
        %v549 = vpop.f32.mrb[0].mxu0
        %v550 = vadd.f32 %v344, %v549
        %v551 = vpop.f32.mrb[0].mxu0
        %v552 = vadd.f32 %v348, %v551
        %553 = vmatprep.mubr.bf16.mxu0 0
        %554 = vmatmul.mubr.bf16.gmra.mrb[0].mxu0 %v316
        %v555 = vpop.f32.mrb[0].mxu0
        %v556 = vadd.f32 %v344, %v555
        %v557 = vpop.f32.mrb[0].mxu0
        %v558 = vadd.f32 %v348, %v557
        %v559 = vpop.f32.mrb[0].mxu0
        %v560 = vadd.f32 %v344, %v559
        %v561 = vpop.f32.mrb[0].mxu0
        %v562 = vadd.f32 %v348, %v561
        %563 = vmatprep.mubr.bf16.mxu0 0
        %564 = vmatmul.mubr.bf16.gmra.mrb[0].mxu0 %v317
        %v565 = vpop.f32.mrb[0].mxu0
        %v566 = vadd.f32 %v344, %v565
        %v567 = vpop.f32.mrb[0].mxu0
        %v568 = vadd.f32 %v348, %v567
        %v569 = vpop.f32.mrb[0].mxu0
        %v570 = vadd.f32 %v344, %v569
        %v571 = vpop.f32.mrb[0].mxu0
        %v572 = vadd.f32 %v348, %v571
        %573 = vmatprep.mubr.bf16.mxu0 0
        %574 = vmatmul.mubr.bf16.gmra.mrb[0].mxu0 %v318
        %v575 = vpop.f32.mrb[0].mxu0
        %v576 = vadd.f32 %v344, %v575
        %v577 = vpop.f32.mrb[0].mxu0
        %v578 = vadd.f32 %v348, %v577
        %v579 = vpop.f32.mrb[0].mxu0
        %v580 = vadd.f32 %v344, %v579
        %v581 = vpop.f32.mrb[0].mxu0
        %v582 = vadd.f32 %v348, %v581
        %583 = vmatprep.mubr.bf16.mxu0 0
        %584 = vmatmul.mubr.bf16.gmra.mrb[0].mxu0 %v319
        %v585 = vpop.f32.mrb[0].mxu0
        %v586 = vadd.f32 %v344, %v585
        %v587 = vpop.f32.mrb[0].mxu0
        %v588 = vadd.f32 %v348, %v587
        %v589 = vpop.f32.mrb[0].mxu0
        %v590 = vadd.f32 %v344, %v589
        %v591 = vpop.f32.mrb[0].mxu0
        %v592 = vadd.f32 %v348, %v591
        %593 = vmatprep.mubr.bf16.mxu0 0
        %594 = vmatmul.mubr.bf16.gmra.mrb[0].mxu0 %v320
        %v595 = vpop.f32.mrb[0].mxu0
        %v596 = vadd.f32 %v344, %v595
        %v597 = vpop.f32.mrb[0].mxu0
        %v598 = vadd.f32 %v348, %v597
        %v599 = vpop.f32.mrb[0].mxu0
        %v600 = vadd.f32 %v344, %v599
        %v601 = vpop.f32.mrb[0].mxu0
        %v602 = vadd.f32 %v348, %v601
        %603 = vmatprep.mubr.bf16.mxu0 0
        %604 = vmatmul.mubr.bf16.gmra.mrb[0].mxu0 %v321
        %v605 = vpop.f32.mrb[0].mxu0
        %v606 = vadd.f32 %v344, %v605
        %v607 = vpop.f32.mrb[0].mxu0
        %v608 = vadd.f32 %v348, %v607
        %v609 = vpop.f32.mrb[0].mxu0
        %v610 = vadd.f32 %v344, %v609
        %v611 = vpop.f32.mrb[0].mxu0
        %v612 = vadd.f32 %v348, %v611
        %613 = vmatprep.mubr.bf16.mxu0 0
        %614 = vmatmul.mubr.bf16.gmra.mrb[0].mxu0 %v322
        %v615 = vpop.f32.mrb[0].mxu0
        %v616 = vadd.f32 %v344, %v615
        %v617 = vpop.f32.mrb[0].mxu0
        %v618 = vadd.f32 %v348, %v617
        %v619 = vpop.f32.mrb[0].mxu0
        %v620 = vadd.f32 %v344, %v619
        %v621 = vpop.f32.mrb[0].mxu0
        %v622 = vadd.f32 %v348, %v621
        %623 = vdwg.mxu0
        %vm624 = vcmp.ge.f32.partialorder %v466, 0.0
        %vm625 = vcmp.ge.f32.partialorder %v468, 0.0
        %vm626 = vcmp.ge.f32.partialorder %v470, 0.0
        %vm627 = vcmp.ge.f32.partialorder %v472, 0.0
        %vm628 = vcmp.ge.f32.partialorder %v476, 0.0
        %vm629 = vcmp.ge.f32.partialorder %v478, 0.0
        %vm630 = vcmp.ge.f32.partialorder %v480, 0.0
        %vm631 = vcmp.ge.f32.partialorder %v482, 0.0
        %vm632 = vcmp.ge.f32.partialorder %v486, 0.0
        %vm633 = vcmp.ge.f32.partialorder %v488, 0.0
        %vm634 = vcmp.ge.f32.partialorder %v490, 0.0
        %vm635 = vcmp.ge.f32.partialorder %v492, 0.0
        %vm636 = vcmp.ge.f32.partialorder %v496, 0.0
        %vm637 = vcmp.ge.f32.partialorder %v498, 0.0
        %vm638 = vcmp.ge.f32.partialorder %v500, 0.0
        %vm639 = vcmp.ge.f32.partialorder %v502, 0.0
        %vm640 = vcmp.ge.f32.partialorder %v506, 0.0
        %vm641 = vcmp.ge.f32.partialorder %v508, 0.0
        %vm642 = vcmp.ge.f32.partialorder %v510, 0.0
        %vm643 = vcmp.ge.f32.partialorder %v512, 0.0
        %vm644 = vcmp.ge.f32.partialorder %v516, 0.0
        %vm645 = vcmp.ge.f32.partialorder %v518, 0.0
        %vm646 = vcmp.ge.f32.partialorder %v520, 0.0
        %vm647 = vcmp.ge.f32.partialorder %v522, 0.0
        %vm648 = vcmp.ge.f32.partialorder %v526, 0.0
        %vm649 = vcmp.ge.f32.partialorder %v528, 0.0
        %vm650 = vcmp.ge.f32.partialorder %v530, 0.0
        %vm651 = vcmp.ge.f32.partialorder %v532, 0.0
        %vm652 = vcmp.ge.f32.partialorder %v536, 0.0
        %vm653 = vcmp.ge.f32.partialorder %v538, 0.0
        %vm654 = vcmp.ge.f32.partialorder %v540, 0.0
        %vm655 = vcmp.ge.f32.partialorder %v542, 0.0
        %vm656 = vcmp.ge.f32.partialorder %v546, 0.0
        %vm657 = vcmp.ge.f32.partialorder %v548, 0.0
        %vm658 = vcmp.ge.f32.partialorder %v550, 0.0
        %vm659 = vcmp.ge.f32.partialorder %v552, 0.0
        %vm660 = vcmp.ge.f32.partialorder %v556, 0.0
        %vm661 = vcmp.ge.f32.partialorder %v558, 0.0
        %vm662 = vcmp.ge.f32.partialorder %v560, 0.0
        %vm663 = vcmp.ge.f32.partialorder %v562, 0.0
        %vm664 = vcmp.ge.f32.partialorder %v566, 0.0
        %vm665 = vcmp.ge.f32.partialorder %v568, 0.0
        %vm666 = vcmp.ge.f32.partialorder %v570, 0.0
        %vm667 = vcmp.ge.f32.partialorder %v572, 0.0
        %vm668 = vcmp.ge.f32.partialorder %v576, 0.0
        %vm669 = vcmp.ge.f32.partialorder %v578, 0.0
        %vm670 = vcmp.ge.f32.partialorder %v580, 0.0
        %vm671 = vcmp.ge.f32.partialorder %v582, 0.0
        %vm672 = vcmp.ge.f32.partialorder %v586, 0.0
        %vm673 = vcmp.ge.f32.partialorder %v588, 0.0
        %vm674 = vcmp.ge.f32.partialorder %v590, 0.0
        %vm675 = vcmp.ge.f32.partialorder %v592, 0.0
        %vm676 = vcmp.ge.f32.partialorder %v596, 0.0
        %vm677 = vcmp.ge.f32.partialorder %v598, 0.0
        %vm678 = vcmp.ge.f32.partialorder %v600, 0.0
        %vm679 = vcmp.ge.f32.partialorder %v602, 0.0
        %vm680 = vcmp.ge.f32.partialorder %v606, 0.0
        %vm681 = vcmp.ge.f32.partialorder %v608, 0.0
        %vm682 = vcmp.ge.f32.partialorder %v610, 0.0
        %vm683 = vcmp.ge.f32.partialorder %v612, 0.0
        %vm684 = vcmp.ge.f32.partialorder %v616, 0.0
        %vm685 = vcmp.ge.f32.partialorder %v618, 0.0
        %vm686 = vcmp.ge.f32.partialorder %v620, 0.0
        %vm687 = vcmp.ge.f32.partialorder %v622, 0.0
        %v688 = vsel %vm624, 1.4142135, 0.28284273
        %v689 = vsel %vm625, 1.4142135, 0.28284273
        %v690 = vsel %vm626, 1.4142135, 0.28284273
        %v691 = vsel %vm627, 1.4142135, 0.28284273
        %v692 = vsel %vm628, 1.4142135, 0.28284273
        %v693 = vsel %vm629, 1.4142135, 0.28284273
        %v694 = vsel %vm630, 1.4142135, 0.28284273
        %v695 = vsel %vm631, 1.4142135, 0.28284273
        %v696 = vsel %vm632, 1.4142135, 0.28284273
        %v697 = vsel %vm633, 1.4142135, 0.28284273
        %v698 = vsel %vm634, 1.4142135, 0.28284273
        %v699 = vsel %vm635, 1.4142135, 0.28284273
        %v700 = vsel %vm636, 1.4142135, 0.28284273
        %v701 = vsel %vm637, 1.4142135, 0.28284273
        %v702 = vsel %vm638, 1.4142135, 0.28284273
        %v703 = vsel %vm639, 1.4142135, 0.28284273
        %v704 = vsel %vm640, 1.4142135, 0.28284273
        %v705 = vsel %vm641, 1.4142135, 0.28284273
        %v706 = vsel %vm642, 1.4142135, 0.28284273
        %v707 = vsel %vm643, 1.4142135, 0.28284273
        %v708 = vsel %vm644, 1.4142135, 0.28284273
        %v709 = vsel %vm645, 1.4142135, 0.28284273
        %v710 = vsel %vm646, 1.4142135, 0.28284273
        %v711 = vsel %vm647, 1.4142135, 0.28284273
        %v712 = vsel %vm648, 1.4142135, 0.28284273
        %v713 = vsel %vm649, 1.4142135, 0.28284273
        %v714 = vsel %vm650, 1.4142135, 0.28284273
        %v715 = vsel %vm651, 1.4142135, 0.28284273
        %v716 = vsel %vm652, 1.4142135, 0.28284273
        %v717 = vsel %vm653, 1.4142135, 0.28284273
        %v718 = vsel %vm654, 1.4142135, 0.28284273
        %v719 = vsel %vm655, 1.4142135, 0.28284273
        %v720 = vsel %vm656, 1.4142135, 0.28284273
        %v721 = vsel %vm657, 1.4142135, 0.28284273
        %v722 = vsel %vm658, 1.4142135, 0.28284273
        %v723 = vsel %vm659, 1.4142135, 0.28284273
        %v724 = vsel %vm660, 1.4142135, 0.28284273
        %v725 = vsel %vm661, 1.4142135, 0.28284273
        %v726 = vsel %vm662, 1.4142135, 0.28284273
        %v727 = vsel %vm663, 1.4142135, 0.28284273
        %v728 = vsel %vm664, 1.4142135, 0.28284273
        %v729 = vsel %vm665, 1.4142135, 0.28284273
        %v730 = vsel %vm666, 1.4142135, 0.28284273
        %v731 = vsel %vm667, 1.4142135, 0.28284273
        %v732 = vsel %vm668, 1.4142135, 0.28284273
        %v733 = vsel %vm669, 1.4142135, 0.28284273
        %v734 = vsel %vm670, 1.4142135, 0.28284273
        %v735 = vsel %vm671, 1.4142135, 0.28284273
        %v736 = vsel %vm672, 1.4142135, 0.28284273
        %v737 = vsel %vm673, 1.4142135, 0.28284273
        %v738 = vsel %vm674, 1.4142135, 0.28284273
        %v739 = vsel %vm675, 1.4142135, 0.28284273
        %v740 = vsel %vm676, 1.4142135, 0.28284273
        %v741 = vsel %vm677, 1.4142135, 0.28284273
        %v742 = vsel %vm678, 1.4142135, 0.28284273
        %v743 = vsel %vm679, 1.4142135, 0.28284273
        %v744 = vsel %vm680, 1.4142135, 0.28284273
        %v745 = vsel %vm681, 1.4142135, 0.28284273
        %v746 = vsel %vm682, 1.4142135, 0.28284273
        %v747 = vsel %vm683, 1.4142135, 0.28284273
        %v748 = vsel %vm684, 1.4142135, 0.28284273
        %v749 = vsel %vm685, 1.4142135, 0.28284273
        %v750 = vsel %vm686, 1.4142135, 0.28284273
        %v751 = vsel %vm687, 1.4142135, 0.28284273
        %v752 = vmul.f32 %v688, %v466
        %v753 = vmul.f32 %v689, %v468
        %v754 = vmul.f32 %v690, %v470
        %v755 = vmul.f32 %v691, %v472
        %v756 = vmul.f32 %v692, %v476
        %v757 = vmul.f32 %v693, %v478
        %v758 = vmul.f32 %v694, %v480
        %v759 = vmul.f32 %v695, %v482
        %v760 = vmul.f32 %v696, %v486
        %v761 = vmul.f32 %v697, %v488
        %v762 = vmul.f32 %v698, %v490
        %v763 = vmul.f32 %v699, %v492
        %v764 = vmul.f32 %v700, %v496
        %v765 = vmul.f32 %v701, %v498
        %v766 = vmul.f32 %v702, %v500
        %v767 = vmul.f32 %v703, %v502
        %v768 = vmul.f32 %v704, %v506
        %v769 = vmul.f32 %v705, %v508
        %v770 = vmul.f32 %v706, %v510
        %v771 = vmul.f32 %v707, %v512
        %v772 = vmul.f32 %v708, %v516
        %v773 = vmul.f32 %v709, %v518
        %v774 = vmul.f32 %v710, %v520
        %v775 = vmul.f32 %v711, %v522
        %v776 = vmul.f32 %v712, %v526
        %v777 = vmul.f32 %v713, %v528
        %v778 = vmul.f32 %v714, %v530
        %v779 = vmul.f32 %v715, %v532
        %v780 = vmul.f32 %v716, %v536
        %v781 = vmul.f32 %v717, %v538
        %v782 = vmul.f32 %v718, %v540
        %v783 = vmul.f32 %v719, %v542
        %v784 = vmul.f32 %v720, %v546
        %v785 = vmul.f32 %v721, %v548
        %v786 = vmul.f32 %v722, %v550
        %v787 = vmul.f32 %v723, %v552
        %v788 = vmul.f32 %v724, %v556
        %v789 = vmul.f32 %v725, %v558
        %v790 = vmul.f32 %v726, %v560
        %v791 = vmul.f32 %v727, %v562
        %v792 = vmul.f32 %v728, %v566
        %v793 = vmul.f32 %v729, %v568
        %v794 = vmul.f32 %v730, %v570
        %v795 = vmul.f32 %v731, %v572
        %v796 = vmul.f32 %v732, %v576
        %v797 = vmul.f32 %v733, %v578
        %v798 = vmul.f32 %v734, %v580
        %v799 = vmul.f32 %v735, %v582
        %v800 = vmul.f32 %v736, %v586
        %v801 = vmul.f32 %v737, %v588
        %v802 = vmul.f32 %v738, %v590
        %v803 = vmul.f32 %v739, %v592
        %v804 = vmul.f32 %v740, %v596
        %v805 = vmul.f32 %v741, %v598
        %v806 = vmul.f32 %v742, %v600
        %v807 = vmul.f32 %v743, %v602
        %v808 = vmul.f32 %v744, %v606
        %v809 = vmul.f32 %v745, %v608
        %v810 = vmul.f32 %v746, %v610
        %v811 = vmul.f32 %v747, %v612
        %v812 = vmul.f32 %v748, %v616
        %v813 = vmul.f32 %v749, %v618
        %v814 = vmul.f32 %v750, %v620
        %v815 = vmul.f32 %v751, %v622
        %v816 = vpack.c.bf16 %v754, %v752
        %v817 = vpack.c.bf16 %v755, %v753
        %v818 = vpack.c.bf16 %v758, %v756
        %v819 = vpack.c.bf16 %v759, %v757
        %v820 = vpack.c.bf16 %v762, %v760
        %v821 = vpack.c.bf16 %v763, %v761
        %v822 = vpack.c.bf16 %v766, %v764
        %v823 = vpack.c.bf16 %v767, %v765
        %v824 = vpack.c.bf16 %v770, %v768
        %v825 = vpack.c.bf16 %v771, %v769
        %v826 = vpack.c.bf16 %v774, %v772
        %v827 = vpack.c.bf16 %v775, %v773
        %v828 = vpack.c.bf16 %v778, %v776
        %v829 = vpack.c.bf16 %v779, %v777
        %v830 = vpack.c.bf16 %v782, %v780
        %v831 = vpack.c.bf16 %v783, %v781
        %v832 = vpack.c.bf16 %v786, %v784
        %v833 = vpack.c.bf16 %v787, %v785
        %v834 = vpack.c.bf16 %v790, %v788
        %v835 = vpack.c.bf16 %v791, %v789
        %v836 = vpack.c.bf16 %v794, %v792
        %v837 = vpack.c.bf16 %v795, %v793
        %v838 = vpack.c.bf16 %v798, %v796
        %v839 = vpack.c.bf16 %v799, %v797
        %v840 = vpack.c.bf16 %v802, %v800
        %v841 = vpack.c.bf16 %v803, %v801
        %v842 = vpack.c.bf16 %v806, %v804
        %v843 = vpack.c.bf16 %v807, %v805
        %v844 = vpack.c.bf16 %v810, %v808
        %v845 = vpack.c.bf16 %v811, %v809
        %v846 = vpack.c.bf16 %v814, %v812
        %v847 = vpack.c.bf16 %v815, %v813
        %v848 = vld [vmem:[#allocation7] sm:$0xf]
        %v849 = vld [vmem:[#allocation7 + $0x4] sm:$0xf]
        %v850 = vld [vmem:[#allocation7 + $0x8] sm:$0xf]
        %v851 = vld [vmem:[#allocation7 + $0xc] sm:$0xf]
        %v852 = vld [vmem:[#allocation7 + $0x10] sm:$0xf]
        %v853 = vld [vmem:[#allocation7 + $0x14] sm:$0xf]
        %v854 = vld [vmem:[#allocation7 + $0x18] sm:$0xf]
        %v855 = vld [vmem:[#allocation7 + $0x1c] sm:$0xf]
        %v856 = vld [vmem:[#allocation7 + $0x20] sm:$0xf]
        %v857 = vld [vmem:[#allocation7 + $0x24] sm:$0xf]
        %v858 = vld [vmem:[#allocation7 + $0x28] sm:$0xf]
        %v859 = vld [vmem:[#allocation7 + $0x2c] sm:$0xf]
        %v860 = vld [vmem:[#allocation7 + $0x30] sm:$0xf]
        %v861 = vld [vmem:[#allocation7 + $0x34] sm:$0xf]
        %v862 = vld [vmem:[#allocation7 + $0x38] sm:$0xf]
        %v863 = vld [vmem:[#allocation7 + $0x3c] sm:$0xf]
        %v864 = vld [vmem:[#allocation7 + $0x40] sm:$0xf]
        %v865 = vld [vmem:[#allocation7 + $0x44] sm:$0xf]
        %v866 = vld [vmem:[#allocation7 + $0x48] sm:$0xf]
        %v867 = vld [vmem:[#allocation7 + $0x4c] sm:$0xf]
        %v868 = vld [vmem:[#allocation7 + $0x50] sm:$0xf]
        %v869 = vld [vmem:[#allocation7 + $0x54] sm:$0xf]
        %v870 = vld [vmem:[#allocation7 + $0x58] sm:$0xf]
        %v871 = vld [vmem:[#allocation7 + $0x5c] sm:$0xf]
        %v872 = vld [vmem:[#allocation7 + $0x60] sm:$0xf]
        %v873 = vld [vmem:[#allocation7 + $0x64] sm:$0xf]
        %v874 = vld [vmem:[#allocation7 + $0x68] sm:$0xf]
        %v875 = vld [vmem:[#allocation7 + $0x6c] sm:$0xf]
        %v876 = vld [vmem:[#allocation7 + $0x70] sm:$0xf]
        %v877 = vld [vmem:[#allocation7 + $0x74] sm:$0xf]
        %v878 = vld [vmem:[#allocation7 + $0x78] sm:$0xf]
        %v879 = vld [vmem:[#allocation7 + $0x7c] sm:$0xf]
        %v880 = vld [vmem:[%s4] sm:$0x1]
        %v882 = vlaneseq
        %v883 = vshrl.u32 %v882, 7
        %v884 = vsub.s32 0, %v883
        %v885 = vrot.slane %v880, %v884
        %v919 = vunpack.c.l.b16 %v848
        %v920 = vunpack.c.l.b16 %v849
        %v921 = vunpack.c.l.b16 %v850
        %v922 = vunpack.c.l.b16 %v851
        %v923 = vunpack.c.l.b16 %v852
        %v924 = vunpack.c.l.b16 %v853
        %v925 = vunpack.c.l.b16 %v854
        %v926 = vunpack.c.l.b16 %v855
        %v927 = vunpack.c.l.b16 %v856
        %v928 = vunpack.c.l.b16 %v857
        %v929 = vunpack.c.l.b16 %v858
        %v930 = vunpack.c.l.b16 %v859
        %v931 = vunpack.c.l.b16 %v860
        %v932 = vunpack.c.l.b16 %v861
        %v933 = vunpack.c.l.b16 %v862
        %v934 = vunpack.c.l.b16 %v863
        %v935 = vunpack.c.l.b16 %v864
        %v936 = vunpack.c.l.b16 %v865
        %v937 = vunpack.c.l.b16 %v866
        %v938 = vunpack.c.l.b16 %v867
        %v939 = vunpack.c.l.b16 %v868
        %v940 = vunpack.c.l.b16 %v869
        %v941 = vunpack.c.l.b16 %v870
        %v942 = vunpack.c.l.b16 %v871
        %v943 = vunpack.c.l.b16 %v872
        %v944 = vunpack.c.l.b16 %v873
        %v945 = vunpack.c.l.b16 %v874
        %v946 = vunpack.c.l.b16 %v875
        %v947 = vunpack.c.l.b16 %v876
        %v948 = vunpack.c.l.b16 %v877
        %v949 = vunpack.c.l.b16 %v878
        %v950 = vunpack.c.l.b16 %v879
        %v951 = vpack.c.b16 %v920, %v919
        %v952 = vpack.c.b16 %v922, %v921
        %v953 = vpack.c.b16 %v924, %v923
        %v954 = vpack.c.b16 %v926, %v925
        %v955 = vpack.c.b16 %v928, %v927
        %v956 = vpack.c.b16 %v930, %v929
        %v957 = vpack.c.b16 %v932, %v931
        %v958 = vpack.c.b16 %v934, %v933
        %v959 = vpack.c.b16 %v936, %v935
        %v960 = vpack.c.b16 %v938, %v937
        %v961 = vpack.c.b16 %v940, %v939
        %v962 = vpack.c.b16 %v942, %v941
        %v963 = vpack.c.b16 %v944, %v943
        %v964 = vpack.c.b16 %v946, %v945
        %v965 = vpack.c.b16 %v948, %v947
        %v966 = vpack.c.b16 %v950, %v949
        %983 = vmatprep.subr.bf16.mxu0 0
        %984 = vmatpush1.bf16.msra.mxu0 %v951
        %985 = vmatprep.subr.bf16.mxu0 0
        %986 = vmatpush1.bf16.msra.mxu0 %v952
        %987 = vmatprep.subr.bf16.mxu0 0
        %988 = vmatpush1.bf16.msra.mxu0 %v953
        %989 = vmatprep.subr.bf16.mxu0 0
        %990 = vmatpush1.bf16.msra.mxu0 %v954
        %991 = vmatprep.subr.bf16.mxu0 0
        %992 = vmatpush1.bf16.msra.mxu0 %v955
        %993 = vmatprep.subr.bf16.mxu0 0
        %994 = vmatpush1.bf16.msra.mxu0 %v956
        %995 = vmatprep.subr.bf16.mxu0 0
        %996 = vmatpush1.bf16.msra.mxu0 %v957
        %997 = vmatprep.subr.bf16.mxu0 0
        %998 = vmatpush1.bf16.msra.mxu0 %v958
        %999 = vmatprep.subr.bf16.mxu0 0
        %1000 = vmatpush1.bf16.msra.mxu0 %v959
        %1001 = vmatprep.subr.bf16.mxu0 0
        %1002 = vmatpush1.bf16.msra.mxu0 %v960
        %1003 = vmatprep.subr.bf16.mxu0 0
        %1004 = vmatpush1.bf16.msra.mxu0 %v961
        %1005 = vmatprep.subr.bf16.mxu0 0
        %1006 = vmatpush1.bf16.msra.mxu0 %v962
        %1007 = vmatprep.subr.bf16.mxu0 0
        %1008 = vmatpush1.bf16.msra.mxu0 %v963
        %1009 = vmatprep.subr.bf16.mxu0 0
        %1010 = vmatpush1.bf16.msra.mxu0 %v964
        %1011 = vmatprep.subr.bf16.mxu0 0
        %1012 = vmatpush1.bf16.msra.mxu0 %v965
        %1013 = vmatprep.subr.bf16.mxu0 0
        %1014 = vmatpush1.bf16.msra.mxu0 %v966
        %1015 = vmatprep.mubr.bf16.mxu0 %v817
        %1016 = vmatmul.mubr.bf16.gmra.mrb[0].mxu0 %v816
        %v1017 = vpop.f32.mrb[0].mxu0
        %v1018 = vadd.f32 %v885, %v1017
        %v1019 = vpop.f32.mrb[0].mxu0
        %v1020 = vpop.f32.mrb[0].mxu0
        %v1021 = vadd.f32 %v885, %v1020
        %v1022 = vpop.f32.mrb[0].mxu0
        %1023 = vmatprep.mubr.bf16.mxu0 %v819
        %1024 = vmatmul.mubr.bf16.gmra.mrb[0].mxu0 %v818
        %v1025 = vpop.f32.mrb[0].mxu0
        %v1026 = vadd.f32 %v885, %v1025
        %v1027 = vpop.f32.mrb[0].mxu0
        %v1028 = vpop.f32.mrb[0].mxu0
        %v1029 = vadd.f32 %v885, %v1028
        %v1030 = vpop.f32.mrb[0].mxu0
        %1031 = vmatprep.mubr.bf16.mxu0 %v821
        %1032 = vmatmul.mubr.bf16.gmra.mrb[0].mxu0 %v820
        %v1033 = vpop.f32.mrb[0].mxu0
        %v1034 = vadd.f32 %v885, %v1033
        %v1035 = vpop.f32.mrb[0].mxu0
        %v1036 = vpop.f32.mrb[0].mxu0
        %v1037 = vadd.f32 %v885, %v1036
        %v1038 = vpop.f32.mrb[0].mxu0
        %1039 = vmatprep.mubr.bf16.mxu0 %v823
        %1040 = vmatmul.mubr.bf16.gmra.mrb[0].mxu0 %v822
        %v1041 = vpop.f32.mrb[0].mxu0
        %v1042 = vadd.f32 %v885, %v1041
        %v1043 = vpop.f32.mrb[0].mxu0
        %v1044 = vpop.f32.mrb[0].mxu0
        %v1045 = vadd.f32 %v885, %v1044
        %v1046 = vpop.f32.mrb[0].mxu0
        %1047 = vmatprep.mubr.bf16.mxu0 %v825
        %1048 = vmatmul.mubr.bf16.gmra.mrb[0].mxu0 %v824
        %v1049 = vpop.f32.mrb[0].mxu0
        %v1050 = vadd.f32 %v885, %v1049
        %v1051 = vpop.f32.mrb[0].mxu0
        %v1052 = vpop.f32.mrb[0].mxu0
        %v1053 = vadd.f32 %v885, %v1052
        %v1054 = vpop.f32.mrb[0].mxu0
        %1055 = vmatprep.mubr.bf16.mxu0 %v827
        %1056 = vmatmul.mubr.bf16.gmra.mrb[0].mxu0 %v826
        %v1057 = vpop.f32.mrb[0].mxu0
        %v1058 = vadd.f32 %v885, %v1057
        %v1059 = vpop.f32.mrb[0].mxu0
        %v1060 = vpop.f32.mrb[0].mxu0
        %v1061 = vadd.f32 %v885, %v1060
        %v1062 = vpop.f32.mrb[0].mxu0
        %1063 = vmatprep.mubr.bf16.mxu0 %v829
        %1064 = vmatmul.mubr.bf16.gmra.mrb[0].mxu0 %v828
        %v1065 = vpop.f32.mrb[0].mxu0
        %v1066 = vadd.f32 %v885, %v1065
        %v1067 = vpop.f32.mrb[0].mxu0
        %v1068 = vpop.f32.mrb[0].mxu0
        %v1069 = vadd.f32 %v885, %v1068
        %v1070 = vpop.f32.mrb[0].mxu0
        %1071 = vmatprep.mubr.bf16.mxu0 %v831
        %1072 = vmatmul.mubr.bf16.gmra.mrb[0].mxu0 %v830
        %v1073 = vpop.f32.mrb[0].mxu0
        %v1074 = vadd.f32 %v885, %v1073
        %v1075 = vpop.f32.mrb[0].mxu0
        %v1076 = vpop.f32.mrb[0].mxu0
        %v1077 = vadd.f32 %v885, %v1076
        %v1078 = vpop.f32.mrb[0].mxu0
        %1079 = vmatprep.mubr.bf16.mxu0 %v833
        %1080 = vmatmul.mubr.bf16.gmra.mrb[0].mxu0 %v832
        %v1081 = vpop.f32.mrb[0].mxu0
        %v1082 = vadd.f32 %v885, %v1081
        %v1083 = vpop.f32.mrb[0].mxu0
        %v1084 = vpop.f32.mrb[0].mxu0
        %v1085 = vadd.f32 %v885, %v1084
        %v1086 = vpop.f32.mrb[0].mxu0
        %1087 = vmatprep.mubr.bf16.mxu0 %v835
        %1088 = vmatmul.mubr.bf16.gmra.mrb[0].mxu0 %v834
        %v1089 = vpop.f32.mrb[0].mxu0
        %v1090 = vadd.f32 %v885, %v1089
        %v1091 = vpop.f32.mrb[0].mxu0
        %v1092 = vpop.f32.mrb[0].mxu0
        %v1093 = vadd.f32 %v885, %v1092
        %v1094 = vpop.f32.mrb[0].mxu0
        %1095 = vmatprep.mubr.bf16.mxu0 %v837
        %1096 = vmatmul.mubr.bf16.gmra.mrb[0].mxu0 %v836
        %v1097 = vpop.f32.mrb[0].mxu0
        %v1098 = vadd.f32 %v885, %v1097
        %v1099 = vpop.f32.mrb[0].mxu0
        %v1100 = vpop.f32.mrb[0].mxu0
        %v1101 = vadd.f32 %v885, %v1100
        %v1102 = vpop.f32.mrb[0].mxu0
        %1103 = vmatprep.mubr.bf16.mxu0 %v839
        %1104 = vmatmul.mubr.bf16.gmra.mrb[0].mxu0 %v838
        %v1105 = vpop.f32.mrb[0].mxu0
        %v1106 = vadd.f32 %v885, %v1105
        %v1107 = vpop.f32.mrb[0].mxu0
        %v1108 = vpop.f32.mrb[0].mxu0
        %v1109 = vadd.f32 %v885, %v1108
        %v1110 = vpop.f32.mrb[0].mxu0
        %1111 = vmatprep.mubr.bf16.mxu0 %v841
        %1112 = vmatmul.mubr.bf16.gmra.mrb[0].mxu0 %v840
        %v1113 = vpop.f32.mrb[0].mxu0
        %v1114 = vadd.f32 %v885, %v1113
        %v1115 = vpop.f32.mrb[0].mxu0
        %v1116 = vpop.f32.mrb[0].mxu0
        %v1117 = vadd.f32 %v885, %v1116
        %v1118 = vpop.f32.mrb[0].mxu0
        %1119 = vmatprep.mubr.bf16.mxu0 %v843
        %1120 = vmatmul.mubr.bf16.gmra.mrb[0].mxu0 %v842
        %v1121 = vpop.f32.mrb[0].mxu0
        %v1122 = vadd.f32 %v885, %v1121
        %v1123 = vpop.f32.mrb[0].mxu0
        %v1124 = vpop.f32.mrb[0].mxu0
        %v1125 = vadd.f32 %v885, %v1124
        %v1126 = vpop.f32.mrb[0].mxu0
        %1127 = vmatprep.mubr.bf16.mxu0 %v845
        %1128 = vmatmul.mubr.bf16.gmra.mrb[0].mxu0 %v844
        %v1129 = vpop.f32.mrb[0].mxu0
        %v1130 = vadd.f32 %v885, %v1129
        %v1131 = vpop.f32.mrb[0].mxu0
        %v1132 = vpop.f32.mrb[0].mxu0
        %v1133 = vadd.f32 %v885, %v1132
        %v1134 = vpop.f32.mrb[0].mxu0
        %1135 = vmatprep.mubr.bf16.mxu0 %v847
        %1136 = vmatmul.mubr.bf16.gmra.mrb[0].mxu0 %v846
        %v1137 = vpop.f32.mrb[0].mxu0
        %v1138 = vadd.f32 %v885, %v1137
        %v1139 = vpop.f32.mrb[0].mxu0
        %v1140 = vpop.f32.mrb[0].mxu0
        %v1141 = vadd.f32 %v885, %v1140
        %v1142 = vpop.f32.mrb[0].mxu0
        %1143 = vdwg.mxu0
        %1144 = vst [vmem:[%s271] sm:$0xff] %v1018
        %1145 = vst [vmem:[%s271 + $0x8] sm:$0xff] %v1021
        %1146 = vst [vmem:[%s271 + $0x10] sm:$0xff] %v1026
        %1147 = vst [vmem:[%s271 + $0x18] sm:$0xff] %v1029
        %1148 = vst [vmem:[%s271 + $0x20] sm:$0xff] %v1034
        %1149 = vst [vmem:[%s271 + $0x28] sm:$0xff] %v1037
        %1150 = vst [vmem:[%s271 + $0x30] sm:$0xff] %v1042
        %1151 = vst [vmem:[%s271 + $0x38] sm:$0xff] %v1045
        %1152 = vst [vmem:[%s271 + $0x40] sm:$0xff] %v1050
        %1153 = vst [vmem:[%s271 + $0x48] sm:$0xff] %v1053
        %1154 = vst [vmem:[%s271 + $0x50] sm:$0xff] %v1058
        %1155 = vst [vmem:[%s271 + $0x58] sm:$0xff] %v1061
        %1156 = vst [vmem:[%s271 + $0x60] sm:$0xff] %v1066
        %1157 = vst [vmem:[%s271 + $0x68] sm:$0xff] %v1069
        %1158 = vst [vmem:[%s271 + $0x70] sm:$0xff] %v1074
        %1159 = vst [vmem:[%s271 + $0x78] sm:$0xff] %v1077
        %1160 = vst [vmem:[%s271 + $0x80] sm:$0xff] %v1082
        %1161 = vst [vmem:[%s271 + $0x88] sm:$0xff] %v1085
        %1162 = vst [vmem:[%s271 + $0x90] sm:$0xff] %v1090
        %1163 = vst [vmem:[%s271 + $0x98] sm:$0xff] %v1093
        %1164 = vst [vmem:[%s271 + $0xa0] sm:$0xff] %v1098
        %1165 = vst [vmem:[%s271 + $0xa8] sm:$0xff] %v1101
        %1166 = vst [vmem:[%s271 + $0xb0] sm:$0xff] %v1106
        %1167 = vst [vmem:[%s271 + $0xb8] sm:$0xff] %v1109
        %1168 = vst [vmem:[%s271 + $0xc0] sm:$0xff] %v1114
        %1169 = vst [vmem:[%s271 + $0xc8] sm:$0xff] %v1117
        %1170 = vst [vmem:[%s271 + $0xd0] sm:$0xff] %v1122
        %1171 = vst [vmem:[%s271 + $0xd8] sm:$0xff] %v1125
        %1172 = vst [vmem:[%s271 + $0xe0] sm:$0xff] %v1130
        %1173 = vst [vmem:[%s271 + $0xe8] sm:$0xff] %v1133
        %1174 = vst [vmem:[%s271 + $0xf0] sm:$0xff] %v1138
        %1175 = vst [vmem:[%s271 + $0xf8] sm:$0xff] %v1141
        %s1176 = sand.u32 %s141, 1
        %s1177 = scalar_lea.sflag [#allocation4], %s1176
        %s1178 = sand.u32 %s141, 1
        %s1179 = smul.addr %s1178, 256
        %s1180 = scalar_lea.vmem [#allocation8], %s1179
        // Predicated region
        $region53: #{tpu_custom_call.1} parent=39 // pred_check
          %p1181 = pneg %p151
        $region54: #{tpu_custom_call.1} parent=39 // pred_check_branch
          %1183 = sbr.rel (%p1181) target = $region56
        $region55: #{tpu_custom_call.1} parent=39 // pred_region
          %s1184 = smul.u32 32, %s23
          %s1186 = ssub.s32 4096, 4096
          %1187 = vsyncadd %s1177, %s1186
          %s1188 = smul.addr %s1184, 128
          %s1189 = scalar_lea.hbm %s5, %s1188
          %s1190 = sshll.u32 %s1180, 4
          %s1191 = int_to_ptr.vmem [resolvable:$true] %s1190
          %1196 = dma.vmem_to_hbm [thread:$0]  %s1191, 4096, %s1189, %s1177, 128, 128, 8
        $region56: #{tpu_custom_call.1} parent=39 // pred_fallthru
          _
      $region40: #{tpu_custom_call.1} parent=5 // pred_fallthru
        _
      %p1197 = scmp.le.s32.totalorder 2, %s18
      // Predicated region
      $region57: #{tpu_custom_call.1} parent=5 // pred_check
        %p1198 = pneg %p1197
      $region58: #{tpu_custom_call.1} parent=5 // pred_check_branch
        %1200 = sbr.rel (%p1198) target = $region60
      $region59: #{tpu_custom_call.1} parent=5 // pred_region
        %s1201 = ssub.s32 %s18, 2
        // Predicated region
        $region61: #{tpu_custom_call.1} parent=59 // pred_check
          %p1202 = pneg %p157
        $region62: #{tpu_custom_call.1} parent=59 // pred_check_branch
          %1204 = sbr.rel (%p1202) target = $region64
        $region63: #{tpu_custom_call.1} parent=59 // pred_region
          %s1205 = sand.u32 %s142, 1
          %s1206 = scalar_lea.sflag [#allocation4], %s1205
          %s1207 = sand.u32 %s142, 1
          %s1208 = smul.addr %s1207, 256
          %s1209 = scalar_lea.vmem [#allocation8], %s1208
          %1210 = dma.done %s1206, 4096
        $region64: #{tpu_custom_call.1} parent=59 // pred_fallthru
          _
      $region60: #{tpu_custom_call.1} parent=5 // pred_fallthru
        _
    $region6: #{tpu_custom_call.1} parent=1 // loop_footer
      %s22 = sadd.s32 1, %s18
    $region7: #{tpu_custom_call.1} parent=1 // loop_footer_branch
      %17 = sbr.rel target = $region3
    $region8: #{tpu_custom_call.1} parent=1 // loop_exit
      _
    %1211 = vsyncpa [#allocation3], 1
    %s1212 = scalar_lea.sflag [#allocation3], 1
    %1213 = vsyncpa %s1212, 1
    %1214 = vsyncpa [#allocation6], 1
    %1215 = vsyncpa [#allocation4], 1
    %s1216 = scalar_lea.sflag [#allocation4], 1
    %1217 = vsyncpa %s1216, 1

// kernel: tpu_custom_call.1
$region0: #{tpu_custom_call.1}
  #allocation0 [shape = 'u32[]', space=smem, size = 0x4, offset = 0x4, fixed_abs, tag = 'smem constant byte address 0x4 - core index']
  #allocation1 [shape = 'u32[144,128]{1,0:T(1,128)}', space=vmem, size = 0x12000, scoped, tag = 'internal scratch']
  %s0 = inlined_call_operand.hbm [shape: f32[512,128], index: 0, kind: input, shape index: {}]
  %s1 = inlined_call_operand.hbm [shape: bf16[128,256], index: 1, kind: input, shape index: {}]
  %s2 = inlined_call_operand.vmem [shape: f32[1,256], index: 2, kind: input, shape index: {}]
  %s3 = inlined_call_operand.hbm [shape: bf16[256,128], index: 3, kind: input, shape index: {}]
  %s4 = inlined_call_operand.vmem [shape: f32[1,128], index: 4, kind: input, shape index: {}]
  %s5 = inlined_call_operand.hbm [shape: f32[512,128], index: 5, kind: output, shape index: {}]
  %s6 = sld [smem:[#allocation0]]
  $region65: #{tpu_custom_call.1} parent=0
    _
  %s8 = ssub.s32 1, %s6
  %s9 = scalar_select 0, %s8, %s6
  $region1: #{tpu_custom_call.1} parent=0
    #allocation2 [shape = 'u8[262144]{0}', space=vmem, size = 0x40000, scoped, tag = 'input window, operand 0']
    #allocation3 [shape = 's32[2]{0}', space=sflag, size = 0x8, scoped, tag = 'scoped memory for tpu_custom_call.1']
    #allocation4 [shape = 's32[2]{0}', space=sflag, size = 0x8, scoped, tag = 'scoped memory for tpu_custom_call.1']
    #allocation5 [shape = 'u8[65536]{0}', space=vmem, size = 0x10000, scoped, tag = 'input window, operand 1, single buffered']
    #allocation6 [shape = 's32[1]{0}', space=sflag, size = 0x4, scoped, tag = 'scoped memory for tpu_custom_call.1']
    #allocation7 [shape = 'u8[65536]{0}', space=vmem, size = 0x10000, scoped, tag = 'input window, operand 3, single buffered']
    #allocation8 [shape = 'u8[262144]{0}', space=vmem, size = 0x40000, scoped, tag = 'output window, operand 0']
    %10 = vsyncpa [#allocation3], 0
    %s11 = scalar_lea.sflag [#allocation3], 1
    %12 = vsyncpa %s11, 0
    %13 = vsyncpa [#allocation6], 0
    %14 = vsyncpa [#allocation4], 0
    %s15 = scalar_lea.sflag [#allocation4], 1
    %16 = vsyncpa %s15, 0
    loop: start=0, step=1, limit=4
    $region2: #{tpu_custom_call.1} parent=1 // loop_pre_header
      _
    $region3: #{tpu_custom_call.1} parent=1 // loop_header
      %s18 = sphi 0, %s22
      %p19 = scmp.ge.s32.totalorder %s18, 4
      %s28 = sphi 0, %s30
      %s31 = sphi 0, %s28
      %s32 = sphi 0, %s31
      %s48 = sphi 0, %s32
      %s52 = sphi 0, %s52
      %s54 = sphi 0, %s52
      %s55 = sphi 0, %s54
      %s69 = sphi 0, %s55
      %s73 = sphi 0, %s73
      %s75 = sphi 0, %s73
      %s76 = sphi 0, %s75
      %s90 = sphi 0, %s76
      %s94 = sphi 0, %s94
      %s96 = sphi 0, %s94
      %s97 = sphi 0, %s96
      %s111 = sphi 0, %s97
      %s115 = sphi 0, %s115
      %s117 = sphi 0, %s115
      %s118 = sphi 0, %s117
      %s132 = sphi 0, %s118
      %s138 = sphi 0, %s140
      %s141 = sphi 0, %s138
      %s142 = sphi 0, %s141
      %s158 = sphi 0, %s142
    $region4: #{tpu_custom_call.1} parent=1 // loop_header_branch
      %21 = sbr.rel (%p19) target = $region8
    $region5: #{tpu_custom_call.1} parent=1 // loop_body
      %s23 = ssub.s32 %s18, 1
      %s24 = ssub.s32 %s18, 2
      %s25 = sadd.s32 %s18, 1
      %s26 = ssub.s32 %s18, %s25
      %p27 = scmp.eq.s32.totalorder %s26, 0
      %s29 = sadd.s32 %s28, 1
      %s30 = scalar_select %p27, %s28, %s29
      %p33 = pneg %p27
      %p34 = scmp.eq.s32.totalorder %s18, 1
      %p35 = por %p33, %p34
      %p36 = scmp.ne.s32.totalorder %s28, %s31
      %p37 = scmp.eq.s32.totalorder %s18, 0
      %p38 = por %p36, %p37
      %p39 = scmp.ne.s32.totalorder %s28, %s31
      %p40 = scmp.eq.s32.totalorder %s23, 1
      %p41 = por %p39, %p40
      %p42 = scmp.ne.s32.totalorder %s31, %s32
      %p43 = scmp.eq.s32.totalorder %s23, 0
      %p44 = por %p42, %p43
      %p45 = scmp.ne.s32.totalorder %s31, %s32
      %p46 = scmp.eq.s32.totalorder %s24, 1
      %p47 = por %p45, %p46
      %p49 = scmp.ne.s32.totalorder %s32, %s48
      %p50 = scmp.eq.s32.totalorder %s24, 0
      %p51 = por %p49, %p50
      %s53 = sadd.s32 %s52, 1
      %p56 = scmp.eq.s32.totalorder %s18, 1
      %p57 = scmp.ne.s32.totalorder %s52, %s54
      %p58 = scmp.eq.s32.totalorder %s18, 0
      %p59 = por %p57, %p58
      %p60 = scmp.ne.s32.totalorder %s52, %s54
      %p61 = scmp.eq.s32.totalorder %s23, 1
      %p62 = por %p60, %p61
      %p63 = scmp.ne.s32.totalorder %s54, %s55
      %p64 = scmp.eq.s32.totalorder %s23, 0
      %p65 = por %p63, %p64
      %p66 = scmp.ne.s32.totalorder %s54, %s55
      %p67 = scmp.eq.s32.totalorder %s24, 1
      %p68 = por %p66, %p67
      %p70 = scmp.ne.s32.totalorder %s55, %s69
      %p71 = scmp.eq.s32.totalorder %s24, 0
      %p72 = por %p70, %p71
      %s74 = sadd.s32 %s73, 1
      %p77 = scmp.eq.s32.totalorder %s18, 1
      %p78 = scmp.ne.s32.totalorder %s73, %s75
      %p79 = scmp.eq.s32.totalorder %s18, 0
      %p80 = por %p78, %p79
      %p81 = scmp.ne.s32.totalorder %s73, %s75
      %p82 = scmp.eq.s32.totalorder %s23, 1
      %p83 = por %p81, %p82
      %p84 = scmp.ne.s32.totalorder %s75, %s76
      %p85 = scmp.eq.s32.totalorder %s23, 0
      %p86 = por %p84, %p85
      %p87 = scmp.ne.s32.totalorder %s75, %s76
      %p88 = scmp.eq.s32.totalorder %s24, 1
      %p89 = por %p87, %p88
      %p91 = scmp.ne.s32.totalorder %s76, %s90
      %p92 = scmp.eq.s32.totalorder %s24, 0
      %p93 = por %p91, %p92
      %s95 = sadd.s32 %s94, 1
      %p98 = scmp.eq.s32.totalorder %s18, 1
      %p99 = scmp.ne.s32.totalorder %s94, %s96
      %p100 = scmp.eq.s32.totalorder %s18, 0
      %p101 = por %p99, %p100
      %p102 = scmp.ne.s32.totalorder %s94, %s96
      %p103 = scmp.eq.s32.totalorder %s23, 1
      %p104 = por %p102, %p103
      %p105 = scmp.ne.s32.totalorder %s96, %s97
      %p106 = scmp.eq.s32.totalorder %s23, 0
      %p107 = por %p105, %p106
      %p108 = scmp.ne.s32.totalorder %s96, %s97
      %p109 = scmp.eq.s32.totalorder %s24, 1
      %p110 = por %p108, %p109
      %p112 = scmp.ne.s32.totalorder %s97, %s111
      %p113 = scmp.eq.s32.totalorder %s24, 0
      %p114 = por %p112, %p113
      %s116 = sadd.s32 %s115, 1
      %p119 = scmp.eq.s32.totalorder %s18, 1
      %p120 = scmp.ne.s32.totalorder %s115, %s117
      %p121 = scmp.eq.s32.totalorder %s18, 0
      %p122 = por %p120, %p121
      %p123 = scmp.ne.s32.totalorder %s115, %s117
      %p124 = scmp.eq.s32.totalorder %s23, 1
      %p125 = por %p123, %p124
      %p126 = scmp.ne.s32.totalorder %s117, %s118
      %p127 = scmp.eq.s32.totalorder %s23, 0
      %p128 = por %p126, %p127
      %p129 = scmp.ne.s32.totalorder %s117, %s118
      %p130 = scmp.eq.s32.totalorder %s24, 1
      %p131 = por %p129, %p130
      %p133 = scmp.ne.s32.totalorder %s118, %s132
      %p134 = scmp.eq.s32.totalorder %s24, 0
      %p135 = por %p133, %p134
      %s136 = ssub.s32 %s18, %s25
      %p137 = scmp.eq.s32.totalorder %s136, 0
      %s139 = sadd.s32 %s138, 1
      %s140 = scalar_select %p137, %s138, %s139
      %p143 = pneg %p137
      %p144 = scmp.eq.s32.totalorder %s18, 1
      %p145 = por %p143, %p144
      %p146 = scmp.ne.s32.totalorder %s138, %s141
      %p147 = scmp.eq.s32.totalorder %s18, 0
      %p148 = por %p146, %p147
      %p149 = scmp.ne.s32.totalorder %s138, %s141
      %p150 = scmp.eq.s32.totalorder %s23, 1
      %p151 = por %p149, %p150
      %p152 = scmp.ne.s32.totalorder %s141, %s142
      %p153 = scmp.eq.s32.totalorder %s23, 0
      %p154 = por %p152, %p153
      %p155 = scmp.ne.s32.totalorder %s141, %s142
      %p156 = scmp.eq.s32.totalorder %s24, 1
      %p157 = por %p155, %p156
      %p159 = scmp.ne.s32.totalorder %s142, %s158
      %p160 = scmp.eq.s32.totalorder %s24, 0
      %p161 = por %p159, %p160
      %p162 = scmp.le.s32.totalorder 1, %s18
      %p163 = scmp.lt.s32.totalorder %s18, 3
      %p164 = pnand %p162, %p163
      %p165 = pneg %p164
      // Predicated region
      $region9: #{tpu_custom_call.1} parent=5 // pred_check
        _
      $region10: #{tpu_custom_call.1} parent=5 // pred_check_branch
        %167 = sbr.rel (%p164) target = $region12
      $region11: #{tpu_custom_call.1} parent=5 // pred_region
        %s168 = ssub.s32 %s18, 1
        // Predicated region
        $region13: #{tpu_custom_call.1} parent=11 // pred_check
          %p169 = pneg %p65
        $region14: #{tpu_custom_call.1} parent=11 // pred_check_branch
          %171 = sbr.rel (%p169) target = $region16
        $region15: #{tpu_custom_call.1} parent=11 // pred_region
          %s173 = ssub.s32 2048, 2048
          %174 = vsyncadd [#allocation6], %s173
          %s175 = sshll.u32 [#allocation5], 4
          %s176 = int_to_ptr.vmem [resolvable:$true] %s175
          %181 = dma.hbm_to_vmem [thread:$0]  %s1, 2048, %s176, [#allocation6], 128, 128, 8
        $region16: #{tpu_custom_call.1} parent=11 // pred_fallthru
          _
        // Predicated region
        $region17: #{tpu_custom_call.1} parent=11 // pred_check
          %p182 = pneg %p86
        $region18: #{tpu_custom_call.1} parent=11 // pred_check_branch
          %184 = sbr.rel (%p182) target = $region20
        $region19: #{tpu_custom_call.1} parent=11 // pred_region
          _
        $region20: #{tpu_custom_call.1} parent=11 // pred_fallthru
          _
        // Predicated region
        $region21: #{tpu_custom_call.1} parent=11 // pred_check
          %p185 = pneg %p107
        $region22: #{tpu_custom_call.1} parent=11 // pred_check_branch
          %187 = sbr.rel (%p185) target = $region24
        $region23: #{tpu_custom_call.1} parent=11 // pred_region
          %s189 = ssub.s32 2048, 2048
          %190 = vsyncadd [#allocation6], %s189
          %s191 = sshll.u32 [#allocation7], 4
          %s192 = int_to_ptr.vmem [resolvable:$true] %s191
          %197 = dma.hbm_to_vmem [thread:$0]  %s3, 2048, %s192, [#allocation6], 64, 64, 4
        $region24: #{tpu_custom_call.1} parent=11 // pred_fallthru
          _
        // Predicated region
        $region25: #{tpu_custom_call.1} parent=11 // pred_check
          %p198 = pneg %p128
        $region26: #{tpu_custom_call.1} parent=11 // pred_check_branch
          %200 = sbr.rel (%p198) target = $region28
        $region27: #{tpu_custom_call.1} parent=11 // pred_region
          _
        $region28: #{tpu_custom_call.1} parent=11 // pred_fallthru
          _
      $region12: #{tpu_custom_call.1} parent=5 // pred_fallthru
        _
      %p201 = scmp.lt.s32.totalorder %s18, 2
      // Predicated region
      $region29: #{tpu_custom_call.1} parent=5 // pred_check
        %p202 = pneg %p201
      $region30: #{tpu_custom_call.1} parent=5 // pred_check_branch
        %204 = sbr.rel (%p202) target = $region32
      $region31: #{tpu_custom_call.1} parent=5 // pred_region
        // Predicated region
        $region33: #{tpu_custom_call.1} parent=31 // pred_check
          %p205 = pneg %p38
        $region34: #{tpu_custom_call.1} parent=31 // pred_check_branch
          %207 = sbr.rel (%p205) target = $region36
        $region35: #{tpu_custom_call.1} parent=31 // pred_region
          %s208 = sand.u32 %s28, 1
          %s209 = scalar_lea.sflag [#allocation3], %s208
          %s210 = sand.u32 %s28, 1
          %s211 = smul.addr %s210, 256
          %s212 = scalar_lea.vmem [#allocation2], %s211
          %s213 = smul.u32 32, %s18
          %s215 = ssub.s32 4096, 4096
          %216 = vsyncadd %s209, %s215
          %s217 = smul.addr %s213, 128
          %s218 = scalar_lea.hbm %s0, %s217
          %s219 = sshll.u32 %s212, 4
          %s220 = int_to_ptr.vmem [resolvable:$true] %s219
          %225 = dma.hbm_to_vmem [thread:$0]  %s218, 4096, %s220, %s209, 128, 128, 8
        $region36: #{tpu_custom_call.1} parent=31 // pred_fallthru
          _
      $region32: #{tpu_custom_call.1} parent=5 // pred_fallthru
        _
      %p226 = scmp.le.s32.totalorder 1, %s18
      %p227 = scmp.lt.s32.totalorder %s18, 3
      %p228 = pnand %p226, %p227
      %p229 = pneg %p228
      // Predicated region
      $region37: #{tpu_custom_call.1} parent=5 // pred_check
        _
      $region38: #{tpu_custom_call.1} parent=5 // pred_check_branch
        %231 = sbr.rel (%p228) target = $region40
      $region39: #{tpu_custom_call.1} parent=5 // pred_region
        %s232 = ssub.s32 %s18, 1
        %s233 = sand.u32 %s31, 1
        %s234 = scalar_lea.sflag [#allocation3], %s233
        %s235 = sand.u32 %s31, 1
        %s236 = smul.addr %s235, 256
        %s237 = scalar_lea.vmem [#allocation2], %s236
        // Predicated region
        $region41: #{tpu_custom_call.1} parent=39 // pred_check
          %p238 = pneg %p44
        $region42: #{tpu_custom_call.1} parent=39 // pred_check_branch
          %240 = sbr.rel (%p238) target = $region44
        $region43: #{tpu_custom_call.1} parent=39 // pred_region
          %241 = dma.done %s234, 4096
        $region44: #{tpu_custom_call.1} parent=39 // pred_fallthru
          _
        // Predicated region
        $region45: #{tpu_custom_call.1} parent=39 // pred_check
          %p242 = pneg %p65
        $region46: #{tpu_custom_call.1} parent=39 // pred_check_branch
          %244 = sbr.rel (%p242) target = $region48
        $region47: #{tpu_custom_call.1} parent=39 // pred_region
          %245 = dma.done [#allocation6], 2048
        $region48: #{tpu_custom_call.1} parent=39 // pred_fallthru
          _
        // Predicated region
        $region49: #{tpu_custom_call.1} parent=39 // pred_check
          %p246 = pneg %p107
        $region50: #{tpu_custom_call.1} parent=39 // pred_check_branch
          %248 = sbr.rel (%p246) target = $region52
        $region51: #{tpu_custom_call.1} parent=39 // pred_region
          %249 = dma.done [#allocation6], 2048
        $region52: #{tpu_custom_call.1} parent=39 // pred_fallthru
          _
        %s250 = sand.u32 %s31, 1
        %s251 = scalar_lea.sflag [#allocation3], %s250
        %s252 = sand.u32 %s31, 1
        %s253 = smul.addr %s252, 256
        %s254 = scalar_lea.vmem [#allocation2], %s253
        %p255 = pneg %p44
        %p256 = pneg %p41
        %p257 = pneg %p65
        %p258 = pneg %p62
        %p259 = pneg %p86
        %p260 = pneg %p83
        %p261 = pneg %p107
        %p262 = pneg %p104
        %p263 = pneg %p128
        %p264 = pneg %p125
        %p265 = pneg %p154
        %p266 = pneg %p151
        %s267 = sand.u32 %s141, 1
        %s268 = scalar_lea.sflag [#allocation4], %s267
        %s269 = sand.u32 %s141, 1
        %s270 = smul.addr %s269, 256
        %s271 = scalar_lea.vmem [#allocation8], %s270
        %s272 = smul.u32 32, %s23
        %s273 = smul.u32 32, %s23
        %v275 = vld [vmem:[%s237] sm:$0xff]
        %v276 = vld [vmem:[%s237 + $0x8] sm:$0xff]
        %v277 = vld [vmem:[%s237 + $0x10] sm:$0xff]
        %v278 = vld [vmem:[%s237 + $0x18] sm:$0xff]
        %v279 = vld [vmem:[%s237 + $0x20] sm:$0xff]
        %v280 = vld [vmem:[%s237 + $0x28] sm:$0xff]
        %v281 = vld [vmem:[%s237 + $0x30] sm:$0xff]
        %v282 = vld [vmem:[%s237 + $0x38] sm:$0xff]
        %v283 = vld [vmem:[%s237 + $0x40] sm:$0xff]
        %v284 = vld [vmem:[%s237 + $0x48] sm:$0xff]
        %v285 = vld [vmem:[%s237 + $0x50] sm:$0xff]
        %v286 = vld [vmem:[%s237 + $0x58] sm:$0xff]
        %v287 = vld [vmem:[%s237 + $0x60] sm:$0xff]
        %v288 = vld [vmem:[%s237 + $0x68] sm:$0xff]
        %v289 = vld [vmem:[%s237 + $0x70] sm:$0xff]
        %v290 = vld [vmem:[%s237 + $0x78] sm:$0xff]
        %v291 = vld [vmem:[%s237 + $0x80] sm:$0xff]
        %v292 = vld [vmem:[%s237 + $0x88] sm:$0xff]
        %v293 = vld [vmem:[%s237 + $0x90] sm:$0xff]
        %v294 = vld [vmem:[%s237 + $0x98] sm:$0xff]
        %v295 = vld [vmem:[%s237 + $0xa0] sm:$0xff]
        %v296 = vld [vmem:[%s237 + $0xa8] sm:$0xff]
        %v297 = vld [vmem:[%s237 + $0xb0] sm:$0xff]
        %v298 = vld [vmem:[%s237 + $0xb8] sm:$0xff]
        %v299 = vld [vmem:[%s237 + $0xc0] sm:$0xff]
        %v300 = vld [vmem:[%s237 + $0xc8] sm:$0xff]
        %v301 = vld [vmem:[%s237 + $0xd0] sm:$0xff]
        %v302 = vld [vmem:[%s237 + $0xd8] sm:$0xff]
        %v303 = vld [vmem:[%s237 + $0xe0] sm:$0xff]
        %v304 = vld [vmem:[%s237 + $0xe8] sm:$0xff]
        %v305 = vld [vmem:[%s237 + $0xf0] sm:$0xff]
        %v306 = vld [vmem:[%s237 + $0xf8] sm:$0xff]
        %v307 = vpack.c.bf16 %v276, %v275
        %v308 = vpack.c.bf16 %v278, %v277
        %v309 = vpack.c.bf16 %v280, %v279
        %v310 = vpack.c.bf16 %v282, %v281
        %v311 = vpack.c.bf16 %v284, %v283
        %v312 = vpack.c.bf16 %v286, %v285
        %v313 = vpack.c.bf16 %v288, %v287
        %v314 = vpack.c.bf16 %v290, %v289
        %v315 = vpack.c.bf16 %v292, %v291
        %v316 = vpack.c.bf16 %v294, %v293
        %v317 = vpack.c.bf16 %v296, %v295
        %v318 = vpack.c.bf16 %v298, %v297
        %v319 = vpack.c.bf16 %v300, %v299
        %v320 = vpack.c.bf16 %v302, %v301
        %v321 = vpack.c.bf16 %v304, %v303
        %v322 = vpack.c.bf16 %v306, %v305
        %v323 = vld [vmem:[#allocation5] sm:$0xff]
        %v324 = vld [vmem:[#allocation5 + $0x8] sm:$0xff]
        %v325 = vld [vmem:[#allocation5 + $0x10] sm:$0xff]
        %v326 = vld [vmem:[#allocation5 + $0x18] sm:$0xff]
        %v327 = vld [vmem:[#allocation5 + $0x20] sm:$0xff]
        %v328 = vld [vmem:[#allocation5 + $0x28] sm:$0xff]
        %v329 = vld [vmem:[#allocation5 + $0x30] sm:$0xff]
        %v330 = vld [vmem:[#allocation5 + $0x38] sm:$0xff]
        %v331 = vld [vmem:[#allocation5 + $0x40] sm:$0xff]
        %v332 = vld [vmem:[#allocation5 + $0x48] sm:$0xff]
        %v333 = vld [vmem:[#allocation5 + $0x50] sm:$0xff]
        %v334 = vld [vmem:[#allocation5 + $0x58] sm:$0xff]
        %v335 = vld [vmem:[#allocation5 + $0x60] sm:$0xff]
        %v336 = vld [vmem:[#allocation5 + $0x68] sm:$0xff]
        %v337 = vld [vmem:[#allocation5 + $0x70] sm:$0xff]
        %v338 = vld [vmem:[#allocation5 + $0x78] sm:$0xff]
        %v339 = vld [vmem:[%s2] sm:$0x3]
        %v341 = vlaneseq
        %v342 = vshrl.u32 %v341, 7
        %v343 = vsub.s32 0, %v342
        %v344 = vrot.slane %v339, %v343
        %v345 = vlaneseq
        %v346 = vshrl.u32 %v345, 7
        %v347 = vsub.s32 1, %v346
        %v348 = vrot.slane %v339, %v347
        %v367 = vunpack.c.l.b16 %v323
        %v368 = vunpack.c.h.b16 %v323
        %v369 = vunpack.c.l.b16 %v324
        %v370 = vunpack.c.h.b16 %v324
        %v371 = vunpack.c.l.b16 %v325
        %v372 = vunpack.c.h.b16 %v325
        %v373 = vunpack.c.l.b16 %v326
        %v374 = vunpack.c.h.b16 %v326
        %v375 = vunpack.c.l.b16 %v327
        %v376 = vunpack.c.h.b16 %v327
        %v377 = vunpack.c.l.b16 %v328
        %v378 = vunpack.c.h.b16 %v328
        %v379 = vunpack.c.l.b16 %v329
        %v380 = vunpack.c.h.b16 %v329
        %v381 = vunpack.c.l.b16 %v330
        %v382 = vunpack.c.h.b16 %v330
        %v383 = vunpack.c.l.b16 %v331
        %v384 = vunpack.c.h.b16 %v331
        %v385 = vunpack.c.l.b16 %v332
        %v386 = vunpack.c.h.b16 %v332
        %v387 = vunpack.c.l.b16 %v333
        %v388 = vunpack.c.h.b16 %v333
        %v389 = vunpack.c.l.b16 %v334
        %v390 = vunpack.c.h.b16 %v334
        %v391 = vunpack.c.l.b16 %v335
        %v392 = vunpack.c.h.b16 %v335
        %v393 = vunpack.c.l.b16 %v336
        %v394 = vunpack.c.h.b16 %v336
        %v395 = vunpack.c.l.b16 %v337
        %v396 = vunpack.c.h.b16 %v337
        %v397 = vunpack.c.l.b16 %v338
        %v398 = vunpack.c.h.b16 %v338
        %v399 = vpack.c.b16 %v369, %v367
        %v400 = vpack.c.b16 %v370, %v368
        %v401 = vpack.c.b16 %v373, %v371
        %v402 = vpack.c.b16 %v374, %v372
        %v403 = vpack.c.b16 %v377, %v375
        %v404 = vpack.c.b16 %v378, %v376
        %v405 = vpack.c.b16 %v381, %v379
        %v406 = vpack.c.b16 %v382, %v380
        %v407 = vpack.c.b16 %v385, %v383
        %v408 = vpack.c.b16 %v386, %v384
        %v409 = vpack.c.b16 %v389, %v387
        %v410 = vpack.c.b16 %v390, %v388
        %v411 = vpack.c.b16 %v393, %v391
        %v412 = vpack.c.b16 %v394, %v392
        %v413 = vpack.c.b16 %v397, %v395
        %v414 = vpack.c.b16 %v398, %v396
        %431 = vmatprep.subr.bf16.mxu0 %v400
        %432 = vmatpush1.bf16.msra.mxu0 %v399
        %433 = vmatprep.subr.bf16.mxu0 %v402
        %434 = vmatpush1.bf16.msra.mxu0 %v401
        %435 = vmatprep.subr.bf16.mxu0 %v404
        %436 = vmatpush1.bf16.msra.mxu0 %v403
        %437 = vmatprep.subr.bf16.mxu0 %v406
        %438 = vmatpush1.bf16.msra.mxu0 %v405
        %439 = vmatprep.subr.bf16.mxu0 %v408
        %440 = vmatpush1.bf16.msra.mxu0 %v407
        %441 = vmatprep.subr.bf16.mxu0 %v410
        %442 = vmatpush1.bf16.msra.mxu0 %v409
        %443 = vmatprep.subr.bf16.mxu0 %v412
        %444 = vmatpush1.bf16.msra.mxu0 %v411
        %445 = vmatprep.subr.bf16.mxu0 %v414
        %446 = vmatpush1.bf16.msra.mxu0 %v413
        %447 = vmatprep.subr.bf16.mxu0 0
        %448 = vmatpush1.bf16.msra.mxu0 0
        %449 = vmatprep.subr.bf16.mxu0 0
        %450 = vmatpush1.bf16.msra.mxu0 0
        %451 = vmatprep.subr.bf16.mxu0 0
        %452 = vmatpush1.bf16.msra.mxu0 0
        %453 = vmatprep.subr.bf16.mxu0 0
        %454 = vmatpush1.bf16.msra.mxu0 0
        %455 = vmatprep.subr.bf16.mxu0 0
        %456 = vmatpush1.bf16.msra.mxu0 0
        %457 = vmatprep.subr.bf16.mxu0 0
        %458 = vmatpush1.bf16.msra.mxu0 0
        %459 = vmatprep.subr.bf16.mxu0 0
        %460 = vmatpush1.bf16.msra.mxu0 0
        %461 = vmatprep.subr.bf16.mxu0 0
        %462 = vmatpush1.bf16.msra.mxu0 0
        %463 = vmatprep.mubr.bf16.mxu0 0
        %464 = vmatmul.mubr.bf16.gmra.mrb[0].mxu0 %v307
        %v465 = vpop.f32.mrb[0].mxu0
        %v466 = vadd.f32 %v344, %v465
        %v467 = vpop.f32.mrb[0].mxu0
        %v468 = vadd.f32 %v348, %v467
        %v469 = vpop.f32.mrb[0].mxu0
        %v470 = vadd.f32 %v344, %v469
        %v471 = vpop.f32.mrb[0].mxu0
        %v472 = vadd.f32 %v348, %v471
        %473 = vmatprep.mubr.bf16.mxu0 0
        %474 = vmatmul.mubr.bf16.gmra.mrb[0].mxu0 %v308
        %v475 = vpop.f32.mrb[0].mxu0
        %v476 = vadd.f32 %v344, %v475
        %v477 = vpop.f32.mrb[0].mxu0
        %v478 = vadd.f32 %v348, %v477
        %v479 = vpop.f32.mrb[0].mxu0
        %v480 = vadd.f32 %v344, %v479
        %v481 = vpop.f32.mrb[0].mxu0
        %v482 = vadd.f32 %v348, %v481
        %483 = vmatprep.mubr.bf16.mxu0 0
        %484 = vmatmul.mubr.bf16.gmra.mrb[0].mxu0 %v309
        %v485 = vpop.f32.mrb[0].mxu0
        %v486 = vadd.f32 %v344, %v485
        %v487 = vpop.f32.mrb[0].mxu0
        %v488 = vadd.f32 %v348, %v487
        %v489 = vpop.f32.mrb[0].mxu0
        %v490 = vadd.f32 %v344, %v489
        %v491 = vpop.f32.mrb[0].mxu0
        %v492 = vadd.f32 %v348, %v491
        %493 = vmatprep.mubr.bf16.mxu0 0
        %494 = vmatmul.mubr.bf16.gmra.mrb[0].mxu0 %v310
        %v495 = vpop.f32.mrb[0].mxu0
        %v496 = vadd.f32 %v344, %v495
        %v497 = vpop.f32.mrb[0].mxu0
        %v498 = vadd.f32 %v348, %v497
        %v499 = vpop.f32.mrb[0].mxu0
        %v500 = vadd.f32 %v344, %v499
        %v501 = vpop.f32.mrb[0].mxu0
        %v502 = vadd.f32 %v348, %v501
        %503 = vmatprep.mubr.bf16.mxu0 0
        %504 = vmatmul.mubr.bf16.gmra.mrb[0].mxu0 %v311
        %v505 = vpop.f32.mrb[0].mxu0
        %v506 = vadd.f32 %v344, %v505
        %v507 = vpop.f32.mrb[0].mxu0
        %v508 = vadd.f32 %v348, %v507
        %v509 = vpop.f32.mrb[0].mxu0
        %v510 = vadd.f32 %v344, %v509
        %v511 = vpop.f32.mrb[0].mxu0
        %v512 = vadd.f32 %v348, %v511
        %513 = vmatprep.mubr.bf16.mxu0 0
        %514 = vmatmul.mubr.bf16.gmra.mrb[0].mxu0 %v312
        %v515 = vpop.f32.mrb[0].mxu0
        %v516 = vadd.f32 %v344, %v515
        %v517 = vpop.f32.mrb[0].mxu0
        %v518 = vadd.f32 %v348, %v517
        %v519 = vpop.f32.mrb[0].mxu0
        %v520 = vadd.f32 %v344, %v519
        %v521 = vpop.f32.mrb[0].mxu0
        %v522 = vadd.f32 %v348, %v521
        %523 = vmatprep.mubr.bf16.mxu0 0
        %524 = vmatmul.mubr.bf16.gmra.mrb[0].mxu0 %v313
        %v525 = vpop.f32.mrb[0].mxu0
        %v526 = vadd.f32 %v344, %v525
        %v527 = vpop.f32.mrb[0].mxu0
        %v528 = vadd.f32 %v348, %v527
        %v529 = vpop.f32.mrb[0].mxu0
        %v530 = vadd.f32 %v344, %v529
        %v531 = vpop.f32.mrb[0].mxu0
        %v532 = vadd.f32 %v348, %v531
        %533 = vmatprep.mubr.bf16.mxu0 0
        %534 = vmatmul.mubr.bf16.gmra.mrb[0].mxu0 %v314
        %v535 = vpop.f32.mrb[0].mxu0
        %v536 = vadd.f32 %v344, %v535
        %v537 = vpop.f32.mrb[0].mxu0
        %v538 = vadd.f32 %v348, %v537
        %v539 = vpop.f32.mrb[0].mxu0
        %v540 = vadd.f32 %v344, %v539
        %v541 = vpop.f32.mrb[0].mxu0
        %v542 = vadd.f32 %v348, %v541
        %543 = vmatprep.mubr.bf16.mxu0 0
        %544 = vmatmul.mubr.bf16.gmra.mrb[0].mxu0 %v315
        %v545 = vpop.f32.mrb[0].mxu0
        %v546 = vadd.f32 %v344, %v545
        %v547 = vpop.f32.mrb[0].mxu0
        %v548 = vadd.f32 %v348, %v547
        %v549 = vpop.f32.mrb[0].mxu0
        %v550 = vadd.f32 %v344, %v549
        %v551 = vpop.f32.mrb[0].mxu0
        %v552 = vadd.f32 %v348, %v551
        %553 = vmatprep.mubr.bf16.mxu0 0
        %554 = vmatmul.mubr.bf16.gmra.mrb[0].mxu0 %v316
        %v555 = vpop.f32.mrb[0].mxu0
        %v556 = vadd.f32 %v344, %v555
        %v557 = vpop.f32.mrb[0].mxu0
        %v558 = vadd.f32 %v348, %v557
        %v559 = vpop.f32.mrb[0].mxu0
        %v560 = vadd.f32 %v344, %v559
        %v561 = vpop.f32.mrb[0].mxu0
        %v562 = vadd.f32 %v348, %v561
        %563 = vmatprep.mubr.bf16.mxu0 0
        %564 = vmatmul.mubr.bf16.gmra.mrb[0].mxu0 %v317
        %v565 = vpop.f32.mrb[0].mxu0
        %v566 = vadd.f32 %v344, %v565
        %v567 = vpop.f32.mrb[0].mxu0
        %v568 = vadd.f32 %v348, %v567
        %v569 = vpop.f32.mrb[0].mxu0
        %v570 = vadd.f32 %v344, %v569
        %v571 = vpop.f32.mrb[0].mxu0
        %v572 = vadd.f32 %v348, %v571
        %573 = vmatprep.mubr.bf16.mxu0 0
        %574 = vmatmul.mubr.bf16.gmra.mrb[0].mxu0 %v318
        %v575 = vpop.f32.mrb[0].mxu0
        %v576 = vadd.f32 %v344, %v575
        %v577 = vpop.f32.mrb[0].mxu0
        %v578 = vadd.f32 %v348, %v577
        %v579 = vpop.f32.mrb[0].mxu0
        %v580 = vadd.f32 %v344, %v579
        %v581 = vpop.f32.mrb[0].mxu0
        %v582 = vadd.f32 %v348, %v581
        %583 = vmatprep.mubr.bf16.mxu0 0
        %584 = vmatmul.mubr.bf16.gmra.mrb[0].mxu0 %v319
        %v585 = vpop.f32.mrb[0].mxu0
        %v586 = vadd.f32 %v344, %v585
        %v587 = vpop.f32.mrb[0].mxu0
        %v588 = vadd.f32 %v348, %v587
        %v589 = vpop.f32.mrb[0].mxu0
        %v590 = vadd.f32 %v344, %v589
        %v591 = vpop.f32.mrb[0].mxu0
        %v592 = vadd.f32 %v348, %v591
        %593 = vmatprep.mubr.bf16.mxu0 0
        %594 = vmatmul.mubr.bf16.gmra.mrb[0].mxu0 %v320
        %v595 = vpop.f32.mrb[0].mxu0
        %v596 = vadd.f32 %v344, %v595
        %v597 = vpop.f32.mrb[0].mxu0
        %v598 = vadd.f32 %v348, %v597
        %v599 = vpop.f32.mrb[0].mxu0
        %v600 = vadd.f32 %v344, %v599
        %v601 = vpop.f32.mrb[0].mxu0
        %v602 = vadd.f32 %v348, %v601
        %603 = vmatprep.mubr.bf16.mxu0 0
        %604 = vmatmul.mubr.bf16.gmra.mrb[0].mxu0 %v321
        %v605 = vpop.f32.mrb[0].mxu0
        %v606 = vadd.f32 %v344, %v605
        %v607 = vpop.f32.mrb[0].mxu0
        %v608 = vadd.f32 %v348, %v607
        %v609 = vpop.f32.mrb[0].mxu0
        %v610 = vadd.f32 %v344, %v609
        %v611 = vpop.f32.mrb[0].mxu0
        %v612 = vadd.f32 %v348, %v611
        %613 = vmatprep.mubr.bf16.mxu0 0
        %614 = vmatmul.mubr.bf16.gmra.mrb[0].mxu0 %v322
        %v615 = vpop.f32.mrb[0].mxu0
        %v616 = vadd.f32 %v344, %v615
        %v617 = vpop.f32.mrb[0].mxu0
        %v618 = vadd.f32 %v348, %v617
        %v619 = vpop.f32.mrb[0].mxu0
        %v620 = vadd.f32 %v344, %v619
        %v621 = vpop.f32.mrb[0].mxu0
        %v622 = vadd.f32 %v348, %v621
        %623 = vdwg.mxu0
        %vm624 = vcmp.ge.f32.partialorder %v466, 0.0
        %vm625 = vcmp.ge.f32.partialorder %v468, 0.0
        %vm626 = vcmp.ge.f32.partialorder %v470, 0.0
        %vm627 = vcmp.ge.f32.partialorder %v472, 0.0
        %vm628 = vcmp.ge.f32.partialorder %v476, 0.0
        %vm629 = vcmp.ge.f32.partialorder %v478, 0.0
        %vm630 = vcmp.ge.f32.partialorder %v480, 0.0
        %vm631 = vcmp.ge.f32.partialorder %v482, 0.0
        %vm632 = vcmp.ge.f32.partialorder %v486, 0.0
        %vm633 = vcmp.ge.f32.partialorder %v488, 0.0
        %vm634 = vcmp.ge.f32.partialorder %v490, 0.0
        %vm635 = vcmp.ge.f32.partialorder %v492, 0.0
        %vm636 = vcmp.ge.f32.partialorder %v496, 0.0
        %vm637 = vcmp.ge.f32.partialorder %v498, 0.0
        %vm638 = vcmp.ge.f32.partialorder %v500, 0.0
        %vm639 = vcmp.ge.f32.partialorder %v502, 0.0
        %vm640 = vcmp.ge.f32.partialorder %v506, 0.0
        %vm641 = vcmp.ge.f32.partialorder %v508, 0.0
        %vm642 = vcmp.ge.f32.partialorder %v510, 0.0
        %vm643 = vcmp.ge.f32.partialorder %v512, 0.0
        %vm644 = vcmp.ge.f32.partialorder %v516, 0.0
        %vm645 = vcmp.ge.f32.partialorder %v518, 0.0
        %vm646 = vcmp.ge.f32.partialorder %v520, 0.0
        %vm647 = vcmp.ge.f32.partialorder %v522, 0.0
        %vm648 = vcmp.ge.f32.partialorder %v526, 0.0
        %vm649 = vcmp.ge.f32.partialorder %v528, 0.0
        %vm650 = vcmp.ge.f32.partialorder %v530, 0.0
        %vm651 = vcmp.ge.f32.partialorder %v532, 0.0
        %vm652 = vcmp.ge.f32.partialorder %v536, 0.0
        %vm653 = vcmp.ge.f32.partialorder %v538, 0.0
        %vm654 = vcmp.ge.f32.partialorder %v540, 0.0
        %vm655 = vcmp.ge.f32.partialorder %v542, 0.0
        %vm656 = vcmp.ge.f32.partialorder %v546, 0.0
        %vm657 = vcmp.ge.f32.partialorder %v548, 0.0
        %vm658 = vcmp.ge.f32.partialorder %v550, 0.0
        %vm659 = vcmp.ge.f32.partialorder %v552, 0.0
        %vm660 = vcmp.ge.f32.partialorder %v556, 0.0
        %vm661 = vcmp.ge.f32.partialorder %v558, 0.0
        %vm662 = vcmp.ge.f32.partialorder %v560, 0.0
        %vm663 = vcmp.ge.f32.partialorder %v562, 0.0
        %vm664 = vcmp.ge.f32.partialorder %v566, 0.0
        %vm665 = vcmp.ge.f32.partialorder %v568, 0.0
        %vm666 = vcmp.ge.f32.partialorder %v570, 0.0
        %vm667 = vcmp.ge.f32.partialorder %v572, 0.0
        %vm668 = vcmp.ge.f32.partialorder %v576, 0.0
        %vm669 = vcmp.ge.f32.partialorder %v578, 0.0
        %vm670 = vcmp.ge.f32.partialorder %v580, 0.0
        %vm671 = vcmp.ge.f32.partialorder %v582, 0.0
        %vm672 = vcmp.ge.f32.partialorder %v586, 0.0
        %vm673 = vcmp.ge.f32.partialorder %v588, 0.0
        %vm674 = vcmp.ge.f32.partialorder %v590, 0.0
        %vm675 = vcmp.ge.f32.partialorder %v592, 0.0
        %vm676 = vcmp.ge.f32.partialorder %v596, 0.0
        %vm677 = vcmp.ge.f32.partialorder %v598, 0.0
        %vm678 = vcmp.ge.f32.partialorder %v600, 0.0
        %vm679 = vcmp.ge.f32.partialorder %v602, 0.0
        %vm680 = vcmp.ge.f32.partialorder %v606, 0.0
        %vm681 = vcmp.ge.f32.partialorder %v608, 0.0
        %vm682 = vcmp.ge.f32.partialorder %v610, 0.0
        %vm683 = vcmp.ge.f32.partialorder %v612, 0.0
        %vm684 = vcmp.ge.f32.partialorder %v616, 0.0
        %vm685 = vcmp.ge.f32.partialorder %v618, 0.0
        %vm686 = vcmp.ge.f32.partialorder %v620, 0.0
        %vm687 = vcmp.ge.f32.partialorder %v622, 0.0
        %v688 = vsel %vm624, 1.4142135, 0.28284273
        %v689 = vsel %vm625, 1.4142135, 0.28284273
        %v690 = vsel %vm626, 1.4142135, 0.28284273
        %v691 = vsel %vm627, 1.4142135, 0.28284273
        %v692 = vsel %vm628, 1.4142135, 0.28284273
        %v693 = vsel %vm629, 1.4142135, 0.28284273
        %v694 = vsel %vm630, 1.4142135, 0.28284273
        %v695 = vsel %vm631, 1.4142135, 0.28284273
        %v696 = vsel %vm632, 1.4142135, 0.28284273
        %v697 = vsel %vm633, 1.4142135, 0.28284273
        %v698 = vsel %vm634, 1.4142135, 0.28284273
        %v699 = vsel %vm635, 1.4142135, 0.28284273
        %v700 = vsel %vm636, 1.4142135, 0.28284273
        %v701 = vsel %vm637, 1.4142135, 0.28284273
        %v702 = vsel %vm638, 1.4142135, 0.28284273
        %v703 = vsel %vm639, 1.4142135, 0.28284273
        %v704 = vsel %vm640, 1.4142135, 0.28284273
        %v705 = vsel %vm641, 1.4142135, 0.28284273
        %v706 = vsel %vm642, 1.4142135, 0.28284273
        %v707 = vsel %vm643, 1.4142135, 0.28284273
        %v708 = vsel %vm644, 1.4142135, 0.28284273
        %v709 = vsel %vm645, 1.4142135, 0.28284273
        %v710 = vsel %vm646, 1.4142135, 0.28284273
        %v711 = vsel %vm647, 1.4142135, 0.28284273
        %v712 = vsel %vm648, 1.4142135, 0.28284273
        %v713 = vsel %vm649, 1.4142135, 0.28284273
        %v714 = vsel %vm650, 1.4142135, 0.28284273
        %v715 = vsel %vm651, 1.4142135, 0.28284273
        %v716 = vsel %vm652, 1.4142135, 0.28284273
        %v717 = vsel %vm653, 1.4142135, 0.28284273
        %v718 = vsel %vm654, 1.4142135, 0.28284273
        %v719 = vsel %vm655, 1.4142135, 0.28284273
        %v720 = vsel %vm656, 1.4142135, 0.28284273
        %v721 = vsel %vm657, 1.4142135, 0.28284273
        %v722 = vsel %vm658, 1.4142135, 0.28284273
        %v723 = vsel %vm659, 1.4142135, 0.28284273
        %v724 = vsel %vm660, 1.4142135, 0.28284273
        %v725 = vsel %vm661, 1.4142135, 0.28284273
        %v726 = vsel %vm662, 1.4142135, 0.28284273
        %v727 = vsel %vm663, 1.4142135, 0.28284273
        %v728 = vsel %vm664, 1.4142135, 0.28284273
        %v729 = vsel %vm665, 1.4142135, 0.28284273
        %v730 = vsel %vm666, 1.4142135, 0.28284273
        %v731 = vsel %vm667, 1.4142135, 0.28284273
        %v732 = vsel %vm668, 1.4142135, 0.28284273
        %v733 = vsel %vm669, 1.4142135, 0.28284273
        %v734 = vsel %vm670, 1.4142135, 0.28284273
        %v735 = vsel %vm671, 1.4142135, 0.28284273
        %v736 = vsel %vm672, 1.4142135, 0.28284273
        %v737 = vsel %vm673, 1.4142135, 0.28284273
        %v738 = vsel %vm674, 1.4142135, 0.28284273
        %v739 = vsel %vm675, 1.4142135, 0.28284273
        %v740 = vsel %vm676, 1.4142135, 0.28284273
        %v741 = vsel %vm677, 1.4142135, 0.28284273
        %v742 = vsel %vm678, 1.4142135, 0.28284273
        %v743 = vsel %vm679, 1.4142135, 0.28284273
        %v744 = vsel %vm680, 1.4142135, 0.28284273
        %v745 = vsel %vm681, 1.4142135, 0.28284273
        %v746 = vsel %vm682, 1.4142135, 0.28284273
        %v747 = vsel %vm683, 1.4142135, 0.28284273
        %v748 = vsel %vm684, 1.4142135, 0.28284273
        %v749 = vsel %vm685, 1.4142135, 0.28284273
        %v750 = vsel %vm686, 1.4142135, 0.28284273
        %v751 = vsel %vm687, 1.4142135, 0.28284273
        %v752 = vmul.f32 %v688, %v466
        %v753 = vmul.f32 %v689, %v468
        %v754 = vmul.f32 %v690, %v470
        %v755 = vmul.f32 %v691, %v472
        %v756 = vmul.f32 %v692, %v476
        %v757 = vmul.f32 %v693, %v478
        %v758 = vmul.f32 %v694, %v480
        %v759 = vmul.f32 %v695, %v482
        %v760 = vmul.f32 %v696, %v486
        %v761 = vmul.f32 %v697, %v488
        %v762 = vmul.f32 %v698, %v490
        %v763 = vmul.f32 %v699, %v492
        %v764 = vmul.f32 %v700, %v496
        %v765 = vmul.f32 %v701, %v498
        %v766 = vmul.f32 %v702, %v500
        %v767 = vmul.f32 %v703, %v502
        %v768 = vmul.f32 %v704, %v506
        %v769 = vmul.f32 %v705, %v508
        %v770 = vmul.f32 %v706, %v510
        %v771 = vmul.f32 %v707, %v512
        %v772 = vmul.f32 %v708, %v516
        %v773 = vmul.f32 %v709, %v518
        %v774 = vmul.f32 %v710, %v520
        %v775 = vmul.f32 %v711, %v522
        %v776 = vmul.f32 %v712, %v526
        %v777 = vmul.f32 %v713, %v528
        %v778 = vmul.f32 %v714, %v530
        %v779 = vmul.f32 %v715, %v532
        %v780 = vmul.f32 %v716, %v536
        %v781 = vmul.f32 %v717, %v538
        %v782 = vmul.f32 %v718, %v540
        %v783 = vmul.f32 %v719, %v542
        %v784 = vmul.f32 %v720, %v546
        %v785 = vmul.f32 %v721, %v548
        %v786 = vmul.f32 %v722, %v550
        %v787 = vmul.f32 %v723, %v552
        %v788 = vmul.f32 %v724, %v556
        %v789 = vmul.f32 %v725, %v558
        %v790 = vmul.f32 %v726, %v560
        %v791 = vmul.f32 %v727, %v562
        %v792 = vmul.f32 %v728, %v566
        %v793 = vmul.f32 %v729, %v568
        %v794 = vmul.f32 %v730, %v570
        %v795 = vmul.f32 %v731, %v572
        %v796 = vmul.f32 %v732, %v576
        %v797 = vmul.f32 %v733, %v578
        %v798 = vmul.f32 %v734, %v580
        %v799 = vmul.f32 %v735, %v582
        %v800 = vmul.f32 %v736, %v586
        %v801 = vmul.f32 %v737, %v588
        %v802 = vmul.f32 %v738, %v590
        %v803 = vmul.f32 %v739, %v592
        %v804 = vmul.f32 %v740, %v596
        %v805 = vmul.f32 %v741, %v598
        %v806 = vmul.f32 %v742, %v600
        %v807 = vmul.f32 %v743, %v602
        %v808 = vmul.f32 %v744, %v606
        %v809 = vmul.f32 %v745, %v608
        %v810 = vmul.f32 %v746, %v610
        %v811 = vmul.f32 %v747, %v612
        %v812 = vmul.f32 %v748, %v616
        %v813 = vmul.f32 %v749, %v618
        %v814 = vmul.f32 %v750, %v620
        %v815 = vmul.f32 %v751, %v622
        %v816 = vpack.c.bf16 %v754, %v752
        %v817 = vpack.c.bf16 %v755, %v753
        %v818 = vpack.c.bf16 %v758, %v756
        %v819 = vpack.c.bf16 %v759, %v757
        %v820 = vpack.c.bf16 %v762, %v760
        %v821 = vpack.c.bf16 %v763, %v761
        %v822 = vpack.c.bf16 %v766, %v764
        %v823 = vpack.c.bf16 %v767, %v765
        %v824 = vpack.c.bf16 %v770, %v768
        %v825 = vpack.c.bf16 %v771, %v769
        %v826 = vpack.c.bf16 %v774, %v772
        %v827 = vpack.c.bf16 %v775, %v773
        %v828 = vpack.c.bf16 %v778, %v776
        %v829 = vpack.c.bf16 %v779, %v777
        %v830 = vpack.c.bf16 %v782, %v780
        %v831 = vpack.c.bf16 %v783, %v781
        %v832 = vpack.c.bf16 %v786, %v784
        %v833 = vpack.c.bf16 %v787, %v785
        %v834 = vpack.c.bf16 %v790, %v788
        %v835 = vpack.c.bf16 %v791, %v789
        %v836 = vpack.c.bf16 %v794, %v792
        %v837 = vpack.c.bf16 %v795, %v793
        %v838 = vpack.c.bf16 %v798, %v796
        %v839 = vpack.c.bf16 %v799, %v797
        %v840 = vpack.c.bf16 %v802, %v800
        %v841 = vpack.c.bf16 %v803, %v801
        %v842 = vpack.c.bf16 %v806, %v804
        %v843 = vpack.c.bf16 %v807, %v805
        %v844 = vpack.c.bf16 %v810, %v808
        %v845 = vpack.c.bf16 %v811, %v809
        %v846 = vpack.c.bf16 %v814, %v812
        %v847 = vpack.c.bf16 %v815, %v813
        %v848 = vld [vmem:[#allocation7] sm:$0xf]
        %v849 = vld [vmem:[#allocation7 + $0x4] sm:$0xf]
        %v850 = vld [vmem:[#allocation7 + $0x8] sm:$0xf]
        %v851 = vld [vmem:[#allocation7 + $0xc] sm:$0xf]
        %v852 = vld [vmem:[#allocation7 + $0x10] sm:$0xf]
        %v853 = vld [vmem:[#allocation7 + $0x14] sm:$0xf]
        %v854 = vld [vmem:[#allocation7 + $0x18] sm:$0xf]
        %v855 = vld [vmem:[#allocation7 + $0x1c] sm:$0xf]
        %v856 = vld [vmem:[#allocation7 + $0x20] sm:$0xf]
        %v857 = vld [vmem:[#allocation7 + $0x24] sm:$0xf]
        %v858 = vld [vmem:[#allocation7 + $0x28] sm:$0xf]
        %v859 = vld [vmem:[#allocation7 + $0x2c] sm:$0xf]
        %v860 = vld [vmem:[#allocation7 + $0x30] sm:$0xf]
        %v861 = vld [vmem:[#allocation7 + $0x34] sm:$0xf]
        %v862 = vld [vmem:[#allocation7 + $0x38] sm:$0xf]
        %v863 = vld [vmem:[#allocation7 + $0x3c] sm:$0xf]
        %v864 = vld [vmem:[#allocation7 + $0x40] sm:$0xf]
        %v865 = vld [vmem:[#allocation7 + $0x44] sm:$0xf]
        %v866 = vld [vmem:[#allocation7 + $0x48] sm:$0xf]
        %v867 = vld [vmem:[#allocation7 + $0x4c] sm:$0xf]
        %v868 = vld [vmem:[#allocation7 + $0x50] sm:$0xf]
        %v869 = vld [vmem:[#allocation7 + $0x54] sm:$0xf]
        %v870 = vld [vmem:[#allocation7 + $0x58] sm:$0xf]
        %v871 = vld [vmem:[#allocation7 + $0x5c] sm:$0xf]
        %v872 = vld [vmem:[#allocation7 + $0x60] sm:$0xf]
        %v873 = vld [vmem:[#allocation7 + $0x64] sm:$0xf]
        %v874 = vld [vmem:[#allocation7 + $0x68] sm:$0xf]
        %v875 = vld [vmem:[#allocation7 + $0x6c] sm:$0xf]
        %v876 = vld [vmem:[#allocation7 + $0x70] sm:$0xf]
        %v877 = vld [vmem:[#allocation7 + $0x74] sm:$0xf]
        %v878 = vld [vmem:[#allocation7 + $0x78] sm:$0xf]
        %v879 = vld [vmem:[#allocation7 + $0x7c] sm:$0xf]
        %v880 = vld [vmem:[%s4] sm:$0x1]
        %v882 = vlaneseq
        %v883 = vshrl.u32 %v882, 7
        %v884 = vsub.s32 0, %v883
        %v885 = vrot.slane %v880, %v884
        %v919 = vunpack.c.l.b16 %v848
        %v920 = vunpack.c.l.b16 %v849
        %v921 = vunpack.c.l.b16 %v850
        %v922 = vunpack.c.l.b16 %v851
        %v923 = vunpack.c.l.b16 %v852
        %v924 = vunpack.c.l.b16 %v853
        %v925 = vunpack.c.l.b16 %v854
        %v926 = vunpack.c.l.b16 %v855
        %v927 = vunpack.c.l.b16 %v856
        %v928 = vunpack.c.l.b16 %v857
        %v929 = vunpack.c.l.b16 %v858
        %v930 = vunpack.c.l.b16 %v859
        %v931 = vunpack.c.l.b16 %v860
        %v932 = vunpack.c.l.b16 %v861
        %v933 = vunpack.c.l.b16 %v862
        %v934 = vunpack.c.l.b16 %v863
        %v935 = vunpack.c.l.b16 %v864
        %v936 = vunpack.c.l.b16 %v865
        %v937 = vunpack.c.l.b16 %v866
        %v938 = vunpack.c.l.b16 %v867
        %v939 = vunpack.c.l.b16 %v868
        %v940 = vunpack.c.l.b16 %v869
        %v941 = vunpack.c.l.b16 %v870
        %v942 = vunpack.c.l.b16 %v871
        %v943 = vunpack.c.l.b16 %v872
        %v944 = vunpack.c.l.b16 %v873
        %v945 = vunpack.c.l.b16 %v874
        %v946 = vunpack.c.l.b16 %v875
        %v947 = vunpack.c.l.b16 %v876
        %v948 = vunpack.c.l.b16 %v877
        %v949 = vunpack.c.l.b16 %v878
        %v950 = vunpack.c.l.b16 %v879
        %v951 = vpack.c.b16 %v920, %v919
        %v952 = vpack.c.b16 %v922, %v921
        %v953 = vpack.c.b16 %v924, %v923
        %v954 = vpack.c.b16 %v926, %v925
        %v955 = vpack.c.b16 %v928, %v927
        %v956 = vpack.c.b16 %v930, %v929
        %v957 = vpack.c.b16 %v932, %v931
        %v958 = vpack.c.b16 %v934, %v933
        %v959 = vpack.c.b16 %v936, %v935
        %v960 = vpack.c.b16 %v938, %v937
        %v961 = vpack.c.b16 %v940, %v939
        %v962 = vpack.c.b16 %v942, %v941
        %v963 = vpack.c.b16 %v944, %v943
        %v964 = vpack.c.b16 %v946, %v945
        %v965 = vpack.c.b16 %v948, %v947
        %v966 = vpack.c.b16 %v950, %v949
        %983 = vmatprep.subr.bf16.mxu0 0
        %984 = vmatpush1.bf16.msra.mxu0 %v951
        %985 = vmatprep.subr.bf16.mxu0 0
        %986 = vmatpush1.bf16.msra.mxu0 %v952
        %987 = vmatprep.subr.bf16.mxu0 0
        %988 = vmatpush1.bf16.msra.mxu0 %v953
        %989 = vmatprep.subr.bf16.mxu0 0
        %990 = vmatpush1.bf16.msra.mxu0 %v954
        %991 = vmatprep.subr.bf16.mxu0 0
        %992 = vmatpush1.bf16.msra.mxu0 %v955
        %993 = vmatprep.subr.bf16.mxu0 0
        %994 = vmatpush1.bf16.msra.mxu0 %v956
        %995 = vmatprep.subr.bf16.mxu0 0
        %996 = vmatpush1.bf16.msra.mxu0 %v957
        %997 = vmatprep.subr.bf16.mxu0 0
        %998 = vmatpush1.bf16.msra.mxu0 %v958
        %999 = vmatprep.subr.bf16.mxu0 0
        %1000 = vmatpush1.bf16.msra.mxu0 %v959
        %1001 = vmatprep.subr.bf16.mxu0 0
        %1002 = vmatpush1.bf16.msra.mxu0 %v960
        %1003 = vmatprep.subr.bf16.mxu0 0
        %1004 = vmatpush1.bf16.msra.mxu0 %v961
        %1005 = vmatprep.subr.bf16.mxu0 0
        %1006 = vmatpush1.bf16.msra.mxu0 %v962
        %1007 = vmatprep.subr.bf16.mxu0 0
        %1008 = vmatpush1.bf16.msra.mxu0 %v963
        %1009 = vmatprep.subr.bf16.mxu0 0
        %1010 = vmatpush1.bf16.msra.mxu0 %v964
        %1011 = vmatprep.subr.bf16.mxu0 0
        %1012 = vmatpush1.bf16.msra.mxu0 %v965
        %1013 = vmatprep.subr.bf16.mxu0 0
        %1014 = vmatpush1.bf16.msra.mxu0 %v966
        %1015 = vmatprep.mubr.bf16.mxu0 %v817
        %1016 = vmatmul.mubr.bf16.gmra.mrb[0].mxu0 %v816
        %v1017 = vpop.f32.mrb[0].mxu0
        %v1018 = vadd.f32 %v885, %v1017
        %v1019 = vpop.f32.mrb[0].mxu0
        %v1020 = vpop.f32.mrb[0].mxu0
        %v1021 = vadd.f32 %v885, %v1020
        %v1022 = vpop.f32.mrb[0].mxu0
        %1023 = vmatprep.mubr.bf16.mxu0 %v819
        %1024 = vmatmul.mubr.bf16.gmra.mrb[0].mxu0 %v818
        %v1025 = vpop.f32.mrb[0].mxu0
        %v1026 = vadd.f32 %v885, %v1025
        %v1027 = vpop.f32.mrb[0].mxu0
        %v1028 = vpop.f32.mrb[0].mxu0
        %v1029 = vadd.f32 %v885, %v1028
        %v1030 = vpop.f32.mrb[0].mxu0
        %1031 = vmatprep.mubr.bf16.mxu0 %v821
        %1032 = vmatmul.mubr.bf16.gmra.mrb[0].mxu0 %v820
        %v1033 = vpop.f32.mrb[0].mxu0
        %v1034 = vadd.f32 %v885, %v1033
        %v1035 = vpop.f32.mrb[0].mxu0
        %v1036 = vpop.f32.mrb[0].mxu0
        %v1037 = vadd.f32 %v885, %v1036
        %v1038 = vpop.f32.mrb[0].mxu0
        %1039 = vmatprep.mubr.bf16.mxu0 %v823
        %1040 = vmatmul.mubr.bf16.gmra.mrb[0].mxu0 %v822
        %v1041 = vpop.f32.mrb[0].mxu0
        %v1042 = vadd.f32 %v885, %v1041
        %v1043 = vpop.f32.mrb[0].mxu0
        %v1044 = vpop.f32.mrb[0].mxu0
        %v1045 = vadd.f32 %v885, %v1044
        %v1046 = vpop.f32.mrb[0].mxu0
        %1047 = vmatprep.mubr.bf16.mxu0 %v825
        %1048 = vmatmul.mubr.bf16.gmra.mrb[0].mxu0 %v824
        %v1049 = vpop.f32.mrb[0].mxu0
        %v1050 = vadd.f32 %v885, %v1049
        %v1051 = vpop.f32.mrb[0].mxu0
        %v1052 = vpop.f32.mrb[0].mxu0
        %v1053 = vadd.f32 %v885, %v1052
        %v1054 = vpop.f32.mrb[0].mxu0
        %1055 = vmatprep.mubr.bf16.mxu0 %v827
        %1056 = vmatmul.mubr.bf16.gmra.mrb[0].mxu0 %v826
        %v1057 = vpop.f32.mrb[0].mxu0
        %v1058 = vadd.f32 %v885, %v1057
        %v1059 = vpop.f32.mrb[0].mxu0
        %v1060 = vpop.f32.mrb[0].mxu0
        %v1061 = vadd.f32 %v885, %v1060
        %v1062 = vpop.f32.mrb[0].mxu0
        %1063 = vmatprep.mubr.bf16.mxu0 %v829
        %1064 = vmatmul.mubr.bf16.gmra.mrb[0].mxu0 %v828
        %v1065 = vpop.f32.mrb[0].mxu0
        %v1066 = vadd.f32 %v885, %v1065
        %v1067 = vpop.f32.mrb[0].mxu0
        %v1068 = vpop.f32.mrb[0].mxu0
        %v1069 = vadd.f32 %v885, %v1068
        %v1070 = vpop.f32.mrb[0].mxu0
        %1071 = vmatprep.mubr.bf16.mxu0 %v831
        %1072 = vmatmul.mubr.bf16.gmra.mrb[0].mxu0 %v830
        %v1073 = vpop.f32.mrb[0].mxu0
        %v1074 = vadd.f32 %v885, %v1073
        %v1075 = vpop.f32.mrb[0].mxu0
        %v1076 = vpop.f32.mrb[0].mxu0
        %v1077 = vadd.f32 %v885, %v1076
        %v1078 = vpop.f32.mrb[0].mxu0
        %1079 = vmatprep.mubr.bf16.mxu0 %v833
        %1080 = vmatmul.mubr.bf16.gmra.mrb[0].mxu0 %v832
        %v1081 = vpop.f32.mrb[0].mxu0
        %v1082 = vadd.f32 %v885, %v1081
        %v1083 = vpop.f32.mrb[0].mxu0
        %v1084 = vpop.f32.mrb[0].mxu0
        %v1085 = vadd.f32 %v885, %v1084
        %v1086 = vpop.f32.mrb[0].mxu0
        %1087 = vmatprep.mubr.bf16.mxu0 %v835
        %1088 = vmatmul.mubr.bf16.gmra.mrb[0].mxu0 %v834
        %v1089 = vpop.f32.mrb[0].mxu0
        %v1090 = vadd.f32 %v885, %v1089
        %v1091 = vpop.f32.mrb[0].mxu0
        %v1092 = vpop.f32.mrb[0].mxu0
        %v1093 = vadd.f32 %v885, %v1092
        %v1094 = vpop.f32.mrb[0].mxu0
        %1095 = vmatprep.mubr.bf16.mxu0 %v837
        %1096 = vmatmul.mubr.bf16.gmra.mrb[0].mxu0 %v836
        %v1097 = vpop.f32.mrb[0].mxu0
        %v1098 = vadd.f32 %v885, %v1097
        %v1099 = vpop.f32.mrb[0].mxu0
        %v1100 = vpop.f32.mrb[0].mxu0
        %v1101 = vadd.f32 %v885, %v1100
        %v1102 = vpop.f32.mrb[0].mxu0
        %1103 = vmatprep.mubr.bf16.mxu0 %v839
        %1104 = vmatmul.mubr.bf16.gmra.mrb[0].mxu0 %v838
        %v1105 = vpop.f32.mrb[0].mxu0
        %v1106 = vadd.f32 %v885, %v1105
        %v1107 = vpop.f32.mrb[0].mxu0
        %v1108 = vpop.f32.mrb[0].mxu0
        %v1109 = vadd.f32 %v885, %v1108
        %v1110 = vpop.f32.mrb[0].mxu0
        %1111 = vmatprep.mubr.bf16.mxu0 %v841
        %1112 = vmatmul.mubr.bf16.gmra.mrb[0].mxu0 %v840
        %v1113 = vpop.f32.mrb[0].mxu0
        %v1114 = vadd.f32 %v885, %v1113
        %v1115 = vpop.f32.mrb[0].mxu0
        %v1116 = vpop.f32.mrb[0].mxu0
        %v1117 = vadd.f32 %v885, %v1116
        %v1118 = vpop.f32.mrb[0].mxu0
        %1119 = vmatprep.mubr.bf16.mxu0 %v843
        %1120 = vmatmul.mubr.bf16.gmra.mrb[0].mxu0 %v842
        %v1121 = vpop.f32.mrb[0].mxu0
        %v1122 = vadd.f32 %v885, %v1121
        %v1123 = vpop.f32.mrb[0].mxu0
        %v1124 = vpop.f32.mrb[0].mxu0
        %v1125 = vadd.f32 %v885, %v1124
        %v1126 = vpop.f32.mrb[0].mxu0
        %1127 = vmatprep.mubr.bf16.mxu0 %v845
        %1128 = vmatmul.mubr.bf16.gmra.mrb[0].mxu0 %v844
        %v1129 = vpop.f32.mrb[0].mxu0
        %v1130 = vadd.f32 %v885, %v1129
        %v1131 = vpop.f32.mrb[0].mxu0
        %v1132 = vpop.f32.mrb[0].mxu0
        %v1133 = vadd.f32 %v885, %v1132
        %v1134 = vpop.f32.mrb[0].mxu0
        %1135 = vmatprep.mubr.bf16.mxu0 %v847
        %1136 = vmatmul.mubr.bf16.gmra.mrb[0].mxu0 %v846
        %v1137 = vpop.f32.mrb[0].mxu0
        %v1138 = vadd.f32 %v885, %v1137
        %v1139 = vpop.f32.mrb[0].mxu0
        %v1140 = vpop.f32.mrb[0].mxu0
        %v1141 = vadd.f32 %v885, %v1140
        %v1142 = vpop.f32.mrb[0].mxu0
        %1143 = vdwg.mxu0
        %1144 = vst [vmem:[%s271] sm:$0xff] %v1018
        %1145 = vst [vmem:[%s271 + $0x8] sm:$0xff] %v1021
        %1146 = vst [vmem:[%s271 + $0x10] sm:$0xff] %v1026
        %1147 = vst [vmem:[%s271 + $0x18] sm:$0xff] %v1029
        %1148 = vst [vmem:[%s271 + $0x20] sm:$0xff] %v1034
        %1149 = vst [vmem:[%s271 + $0x28] sm:$0xff] %v1037
        %1150 = vst [vmem:[%s271 + $0x30] sm:$0xff] %v1042
        %1151 = vst [vmem:[%s271 + $0x38] sm:$0xff] %v1045
        %1152 = vst [vmem:[%s271 + $0x40] sm:$0xff] %v1050
        %1153 = vst [vmem:[%s271 + $0x48] sm:$0xff] %v1053
        %1154 = vst [vmem:[%s271 + $0x50] sm:$0xff] %v1058
        %1155 = vst [vmem:[%s271 + $0x58] sm:$0xff] %v1061
        %1156 = vst [vmem:[%s271 + $0x60] sm:$0xff] %v1066
        %1157 = vst [vmem:[%s271 + $0x68] sm:$0xff] %v1069
        %1158 = vst [vmem:[%s271 + $0x70] sm:$0xff] %v1074
        %1159 = vst [vmem:[%s271 + $0x78] sm:$0xff] %v1077
        %1160 = vst [vmem:[%s271 + $0x80] sm:$0xff] %v1082
        %1161 = vst [vmem:[%s271 + $0x88] sm:$0xff] %v1085
        %1162 = vst [vmem:[%s271 + $0x90] sm:$0xff] %v1090
        %1163 = vst [vmem:[%s271 + $0x98] sm:$0xff] %v1093
        %1164 = vst [vmem:[%s271 + $0xa0] sm:$0xff] %v1098
        %1165 = vst [vmem:[%s271 + $0xa8] sm:$0xff] %v1101
        %1166 = vst [vmem:[%s271 + $0xb0] sm:$0xff] %v1106
        %1167 = vst [vmem:[%s271 + $0xb8] sm:$0xff] %v1109
        %1168 = vst [vmem:[%s271 + $0xc0] sm:$0xff] %v1114
        %1169 = vst [vmem:[%s271 + $0xc8] sm:$0xff] %v1117
        %1170 = vst [vmem:[%s271 + $0xd0] sm:$0xff] %v1122
        %1171 = vst [vmem:[%s271 + $0xd8] sm:$0xff] %v1125
        %1172 = vst [vmem:[%s271 + $0xe0] sm:$0xff] %v1130
        %1173 = vst [vmem:[%s271 + $0xe8] sm:$0xff] %v1133
        %1174 = vst [vmem:[%s271 + $0xf0] sm:$0xff] %v1138
        %1175 = vst [vmem:[%s271 + $0xf8] sm:$0xff] %v1141
        %s1176 = sand.u32 %s141, 1
        %s1177 = scalar_lea.sflag [#allocation4], %s1176
        %s1178 = sand.u32 %s141, 1
        %s1179 = smul.addr %s1178, 256
        %s1180 = scalar_lea.vmem [#allocation8], %s1179
        // Predicated region
        $region53: #{tpu_custom_call.1} parent=39 // pred_check
          %p1181 = pneg %p151
        $region54: #{tpu_custom_call.1} parent=39 // pred_check_branch
          %1183 = sbr.rel (%p1181) target = $region56
        $region55: #{tpu_custom_call.1} parent=39 // pred_region
          %s1184 = smul.u32 32, %s23
          %s1186 = ssub.s32 4096, 4096
          %1187 = vsyncadd %s1177, %s1186
          %s1188 = smul.addr %s1184, 128
          %s1189 = scalar_lea.hbm %s5, %s1188
          %s1190 = sshll.u32 %s1180, 4
          %s1191 = int_to_ptr.vmem [resolvable:$true] %s1190
          %1196 = dma.vmem_to_hbm [thread:$0]  %s1191, 4096, %s1189, %s1177, 128, 128, 8
        $region56: #{tpu_custom_call.1} parent=39 // pred_fallthru
          _
      $region40: #{tpu_custom_call.1} parent=5 // pred_fallthru
        _
      %p1197 = scmp.le.s32.totalorder 2, %s18
      // Predicated region
      $region57: #{tpu_custom_call.1} parent=5 // pred_check
        %p1198 = pneg %p1197
      $region58: #{tpu_custom_call.1} parent=5 // pred_check_branch
        %1200 = sbr.rel (%p1198) target = $region60
      $region59: #{tpu_custom_call.1} parent=5 // pred_region
        %s1201 = ssub.s32 %s18, 2
        // Predicated region
        $region61: #{tpu_custom_call.1} parent=59 // pred_check
          %p1202 = pneg %p157
        $region62: #{tpu_custom_call.1} parent=59 // pred_check_branch
          %1204 = sbr.rel (%p1202) target = $region64
        $region63: #{tpu_custom_call.1} parent=59 // pred_region
          %s1205 = sand.u32 %s142, 1
          %s1206 = scalar_lea.sflag [#allocation4], %s1205
          %s1207 = sand.u32 %s142, 1
          %s1208 = smul.addr %s1207, 256
          %s1209 = scalar_lea.vmem [#allocation8], %s1208
          %1210 = dma.done %s1206, 4096
        $region64: #{tpu_custom_call.1} parent=59 // pred_fallthru
          _
      $region60: #{tpu_custom_call.1} parent=5 // pred_fallthru
        _
    $region6: #{tpu_custom_call.1} parent=1 // loop_footer
      %s22 = sadd.s32 1, %s18
    $region7: #{tpu_custom_call.1} parent=1 // loop_footer_branch
      %17 = sbr.rel target = $region3
    $region8: #{tpu_custom_call.1} parent=1 // loop_exit
      _
    %1211 = vsyncpa [#allocation3], 1
    %s1212 = scalar_lea.sflag [#allocation3], 1
    %1213 = vsyncpa %s1212, 1
    %1214 = vsyncpa [#allocation6], 1
    %1215 = vsyncpa [#allocation4], 1
    %s1216 = scalar_lea.sflag [#allocation4], 1
    %1217 = vsyncpa %s1216, 1

</llo_original>
